<compile_context>
chip_gen: v6e
topology: v6e:2x2x1
jax: 0.10.0
libtpu: 0.0.40
codegen_flags: <defaults>
</compile_context>

<pallas_src>
import functools
import math

import jax
import jax.numpy as jnp
from jax.experimental import pallas as pl
from jax.experimental.pallas import tpu as pltpu


# Plain Python floats only: jnp scalars created at module scope are concrete
# arrays and would be captured as kernel constants (pallas_call rejects that).
_INV_SQRT2 = 0.7071067811865476
_LN_EPS = 1e-5


def _round_up(x, m):
    return ((x + m - 1) // m) * m


def _connector_kernel(x_ref, w1_ref, w2_ref, aux_ref, o_ref, *, compute_dtype):
    """Fused Linear -> GELU(erf) -> Linear -> LayerNorm(fp32) for one row tile.

    aux_ref rows: 0 = b1, 1 = b2, 2 = LN gamma, 3 = LN beta (all fp32).
    """
    # In-kernel downcast: x stays fp32 in HBM; the VPU cast hides under the MXU.
    x = x_ref[...].astype(compute_dtype)                       # (tm, D)

    aux = aux_ref[...]                                          # (4, E) fp32
    b1 = aux[0:1, :]
    b2 = aux[1:2, :]
    gamma = aux[2:3, :]
    beta = aux[3:4, :]

    # Linear 1 on the MXU: bf16 x bf16 -> fp32 accumulate, fp32 bias add.
    h = jnp.dot(x, w1_ref[...], preferred_element_type=jnp.float32) + b1

    # Exact GELU (matches torch.nn.GELU default, erf based).
    h = 0.5 * h * (1.0 + jax.lax.erf(h * _INV_SQRT2))

    # Linear 2 on the MXU (activations downcast to the weight compute dtype).
    y = jnp.dot(h.astype(compute_dtype), w2_ref[...],
                preferred_element_type=jnp.float32) + b2        # (tm, E) fp32

    # LayerNorm in fp32 (the torch LayerNorm subclass always upcasts to fp32).
    # One-pass statistics: the two cross-lane reductions issue independently.
    inv_e = 1.0 / y.shape[-1]
    s1 = jnp.sum(y, axis=-1, keepdims=True)
    s2 = jnp.sum(y * y, axis=-1, keepdims=True)
    mean = s1 * inv_e
    var = jnp.maximum(s2 * inv_e - mean * mean, 0.0)
    yn = (y - mean) * jax.lax.rsqrt(var + _LN_EPS)
    yn = yn * gamma + beta

    o_ref[...] = yn.astype(o_ref.dtype)


def pack_connector_params(params, compute_dtype=jnp.bfloat16):
    """One-time prep OUTSIDE the hot path: weights -> compute dtype,
    biases / LN params packed into a single (4, E) fp32 operand."""
    w1t, b1, w2t, b2, gamma, beta = params
    aux = jnp.stack(
        [b1.astype(jnp.float32), b2.astype(jnp.float32),
         gamma.astype(jnp.float32), beta.astype(jnp.float32)], axis=0)
    return (w1t.astype(compute_dtype), w2t.astype(compute_dtype), aux)


def connector_forward(image_features, packed_params, *, compute_dtype=jnp.bfloat16,
                      max_tm=1024, out_dtype=None):
    """Applies the connector MLP to image_features of shape (B, N, D).

    packed_params: output of pack_connector_params (weights already in the
    compute dtype so no per-call conversion pass is launched).
    out_dtype: defaults to the input dtype; pass jnp.bfloat16 if the
    downstream LLM consumes bf16 embeddings to halve writeback bytes.
    """
    B, N, D = image_features.shape
    w1c, w2c, aux = packed_params
    E = w1c.shape[1]
    M = B * N
    out_dtype = image_features.dtype if out_dtype is None else out_dtype

    # Row tiling: target >= 2 evenly sized tiles (balanced megacore split on
    # v7x), each <= max_tm rows, rounded to the 16-row bf16 sublane packing.
    row_align = 16 if jnp.dtype(compute_dtype).itemsize == 2 else 8
    n_target = max(2, pl.cdiv(M, max_tm))
    if n_target % 2:
        n_target += 1
    tm = min(_round_up(pl.cdiv(M, n_target), row_align), _round_up(M, row_align))
    n_tiles = pl.cdiv(M, tm)
    n_rows = n_tiles * tm

    # Flatten exactly like `image_features.view(B*N, D)` (free, contiguous
    # reshape).  Zero-pad only the ragged tail rows; pad rows flow through
    # LayerNorm with var=0 (rsqrt(eps) path), stay finite and are sliced off.
    x2d = image_features.reshape(M, D)
    if n_rows != M:
        x2d = jnp.pad(x2d, ((0, n_rows - M), (0, 0)))

    # VMEM budget from the actual operand footprint, clamped to the queried
    # per-core capacity (64 MiB on v7x, 128 MiB on v5e/v6e) minus headroom.
    w_itemsize = jnp.dtype(compute_dtype).itemsize
    w_bytes = (D * E + E * E) * w_itemsize * 2          # resident weights, x2 buffers
    aux_bytes = 8 * E * 4 * 2                           # (4,E) padded to 8 sublanes
    io_bytes = (tm * D * jnp.dtype(x2d.dtype).itemsize
                + tm * E * jnp.dtype(out_dtype).itemsize) * 2
    needed = int((w_bytes + aux_bytes + io_bytes) * 1.25) + (4 << 20)
    try:
        vmem_cap = int(pltpu.get_tpu_info().vmem_capacity_bytes)
    except Exception:
        vmem_cap = 64 << 20                             # v7x per-core floor
    vmem_limit = max(16 << 20, min(needed, vmem_cap - (8 << 20)))

    cost = pl.CostEstimate(
        flops=2 * M * D * E + 2 * M * E * E,
        transcendentals=M * E,                          # advisory (erf ~ 1/elem)
        bytes_accessed=(M * D * jnp.dtype(x2d.dtype).itemsize
                        + (D * E + E * E) * w_itemsize
                        + M * E * jnp.dtype(out_dtype).itemsize),
    )

    kernel = functools.partial(_connector_kernel, compute_dtype=compute_dtype)

    out = pl.pallas_call(
        kernel,
        out_shape=jax.ShapeDtypeStruct((n_rows, E), out_dtype),
        grid_spec=pltpu.PrefetchScalarGridSpec(
            num_scalar_prefetch=0,
            grid=(n_tiles,),
            in_specs=[
                pl.BlockSpec((tm, D), lambda i: (i, 0)),   # x rows (fp32 in HBM)
                pl.BlockSpec((D, E), lambda i: (0, 0)),    # W1^T (VMEM-resident)
                pl.BlockSpec((E, E), lambda i: (0, 0)),    # W2^T (VMEM-resident)
                pl.BlockSpec((4, E), lambda i: (0, 0)),    # [b1; b2; gamma; beta]
            ],
            out_specs=pl.BlockSpec((tm, E), lambda i: (i, 0)),
        ),
        compiler_params=pltpu.CompilerParams(
            dimension_semantics=("parallel",),
            vmem_limit_bytes=vmem_limit,
        ),
        cost_estimate=cost,
    )(x2d, w1c, w2c, aux)

    return out[:M].reshape(B, N, E)


def init_connector_params(key, embed_dim, embedding_size, dtype=jnp.float32):
    """Deterministic init mirroring _initialize_weights:
    kaiming_uniform_(nonlinearity='relu') -> U(-sqrt(6/fan_in), sqrt(6/fan_in)),
    biases zero, LayerNorm gamma=1 / beta=0."""
    k1, k2 = jax.random.split(key)

    bound1 = math.sqrt(6.0 / embed_dim)
    w1 = jax.random.uniform(k1, (embedding_size, embed_dim), dtype,
                            minval=-bound1, maxval=bound1)     # torch layout (out, in)
    b1 = jnp.zeros((embedding_size,), dtype)

    bound2 = math.sqrt(6.0 / embedding_size)
    w2 = jax.random.uniform(k2, (embedding_size, embedding_size), dtype,
                            minval=-bound2, maxval=bound2)
    b2 = jnp.zeros((embedding_size,), dtype)

    gamma = jnp.ones((embedding_size,), dtype)
    beta = jnp.zeros((embedding_size,), dtype)

    # Pre-transpose weights so the kernel computes x @ W^T as x @ (W.T)
    return (w1.T, b1, w2.T, b2, gamma, beta)


def connector_reference(image_features, params, compute_dtype=jnp.bfloat16):
    """Pure-JAX reference mirroring the kernel's precision choices."""
    w1t, b1, w2t, b2, gamma, beta = params
    B, N, D = image_features.shape
    x = image_features.reshape(B * N, D).astype(compute_dtype)
    h = jnp.dot(x, w1t.astype(compute_dtype),
                preferred_element_type=jnp.float32) + b1.astype(jnp.float32)
    h = 0.5 * h * (1.0 + jax.lax.erf(h * _INV_SQRT2))
    y = jnp.dot(h.astype(compute_dtype), w2t.astype(compute_dtype),
                preferred_element_type=jnp.float32) + b2.astype(jnp.float32)
    mean = jnp.mean(y, axis=-1, keepdims=True)
    var = jnp.mean(jnp.square(y - mean), axis=-1, keepdims=True)
    yn = (y - mean) * jax.lax.rsqrt(var + _LN_EPS)
    yn = yn * gamma.astype(jnp.float32) + beta.astype(jnp.float32)
    return yn.astype(image_features.dtype).reshape(B, N, -1)


if __name__ == "__main__":
    # Small shapes consistent with the module:
    #   batch=2 images, n_patches=300 (ragged on purpose),
    #   embed_dim=128 (visual feature dim), embedding_size=256 (LLM embed dim).
    B, N, D, E = 2, 300, 128, 256

    key = jax.random.PRNGKey(0)
    k_x, k_p = jax.random.split(key)
    image_features = jax.random.normal(k_x, (B, N, D), jnp.float32)
    params = init_connector_params(k_p, D, E)
    packed = pack_connector_params(params)          # one-time weight cast / packing

    out = connector_forward(image_features, packed)  # 2 tiles x 304 rows, bf16 MXU
    out = jax.block_until_ready(out)

    ref = connector_reference(image_features, params)
    assert out.shape == (B, N, E)
    assert jnp.allclose(out, ref, atol=1e-2, rtol=1e-2), "mismatch vs reference"

    print("KERNEL_OK")
</pallas_src>

<mosaic_0001>
module attributes {stable_mosaic.version = 11 : i64} {
  func.func @_connector_kernel(%arg0: i32, %arg1: memref<304x128xf32, #tpu.memory_space<vmem>>, %arg2: memref<128x256xbf16, #tpu.memory_space<vmem>>, %arg3: memref<256x256xbf16, #tpu.memory_space<vmem>>, %arg4: memref<4x256xf32, #tpu.memory_space<vmem>>, %arg5: memref<304x256xf32, #tpu.memory_space<vmem>>) attributes {dimension_semantics = [#tpu.dimension_semantics<parallel>], iteration_bounds = array<i64: 2>, scalar_prefetch = 0 : i64, scratch_operands = 0 : i64, tpu.core_type = #tpu.core_type<tc>, window_params = [{transform_indices = @transform_0, window_bounds = array<i64: 304, 128>}, {pipeline_mode = #tpu.pipeline_mode<synchronous>, transform_indices = @transform_1, window_bounds = array<i64: 128, 256>}, {pipeline_mode = #tpu.pipeline_mode<synchronous>, transform_indices = @transform_2, window_bounds = array<i64: 256, 256>}, {pipeline_mode = #tpu.pipeline_mode<synchronous>, transform_indices = @transform_3, window_bounds = array<i64: 4, 256>}, {transform_indices = @transform_4, window_bounds = array<i64: 304, 256>}]} {
    %c0 = arith.constant 0 : index
    %c0_0 = arith.constant 0 : index
    %0 = vector.load %arg1[%c0, %c0_0] : memref<304x128xf32, #tpu.memory_space<vmem>>, vector<304x128xf32>
    %1 = arith.truncf %0 : vector<304x128xf32> to vector<304x128xbf16>
    %c0_1 = arith.constant 0 : index
    %c0_2 = arith.constant 0 : index
    %2 = vector.load %arg4[%c0_1, %c0_2] : memref<4x256xf32, #tpu.memory_space<vmem>>, vector<4x256xf32>
    %3 = vector.extract_strided_slice %2 {offsets = [0, 0], sizes = [1, 256], strides = [1, 1]} : vector<4x256xf32> to vector<1x256xf32>
    %4 = vector.extract_strided_slice %2 {offsets = [1, 0], sizes = [1, 256], strides = [1, 1]} : vector<4x256xf32> to vector<1x256xf32>
    %5 = vector.extract_strided_slice %2 {offsets = [2, 0], sizes = [1, 256], strides = [1, 1]} : vector<4x256xf32> to vector<1x256xf32>
    %6 = vector.extract_strided_slice %2 {offsets = [3, 0], sizes = [1, 256], strides = [1, 1]} : vector<4x256xf32> to vector<1x256xf32>
    %c0_3 = arith.constant 0 : index
    %c0_4 = arith.constant 0 : index
    %7 = vector.load %arg2[%c0_3, %c0_4] : memref<128x256xbf16, #tpu.memory_space<vmem>>, vector<128x256xbf16>
    %cst = arith.constant dense<0.000000e+00> : vector<304x256xf32>
    %8 = tpu.matmul %1, %7, %cst {dimension_numbers = #tpu.dot_dimension_numbers<[1], [0], [0], [1], [0, 0, 1, 1], [], []>} : vector<304x128xbf16>, vector<128x256xbf16>, vector<304x256xf32> -> vector<304x256xf32>
    %9 = vector.broadcast %3 : vector<1x256xf32> to vector<304x256xf32>
    %10 = arith.addf %8, %9 : vector<304x256xf32>
    %cst_5 = arith.constant 5.000000e-01 : f32
    %11 = vector.broadcast %cst_5 : f32 to vector<304x256xf32>
    %12 = arith.mulf %11, %10 : vector<304x256xf32>
    %cst_6 = arith.constant 0.707106769 : f32
    %13 = vector.broadcast %cst_6 : f32 to vector<304x256xf32>
    %14 = arith.mulf %10, %13 : vector<304x256xf32>
    %15 = math.erf %14 : vector<304x256xf32>
    %cst_7 = arith.constant 1.000000e+00 : f32
    %16 = vector.broadcast %cst_7 : f32 to vector<304x256xf32>
    %17 = arith.addf %16, %15 : vector<304x256xf32>
    %18 = arith.mulf %12, %17 : vector<304x256xf32>
    %19 = arith.truncf %18 : vector<304x256xf32> to vector<304x256xbf16>
    %c0_8 = arith.constant 0 : index
    %c0_9 = arith.constant 0 : index
    %20 = vector.load %arg3[%c0_8, %c0_9] : memref<256x256xbf16, #tpu.memory_space<vmem>>, vector<256x256xbf16>
    %cst_10 = arith.constant dense<0.000000e+00> : vector<304x256xf32>
    %21 = tpu.matmul %19, %20, %cst_10 {dimension_numbers = #tpu.dot_dimension_numbers<[1], [0], [0], [1], [0, 0, 1, 1], [], []>} : vector<304x256xbf16>, vector<256x256xbf16>, vector<304x256xf32> -> vector<304x256xf32>
    %22 = vector.broadcast %4 : vector<1x256xf32> to vector<304x256xf32>
    %23 = arith.addf %21, %22 : vector<304x256xf32>
    %cst_11 = arith.constant dense<0.000000e+00> : vector<304xf32>
    %24 = vector.multi_reduction <add>, %23, %cst_11 [1] : vector<304x256xf32> to vector<304xf32>
    %25 = vector.shape_cast %24 : vector<304xf32> to vector<304x1xf32>
    %26 = arith.mulf %23, %23 : vector<304x256xf32>
    %cst_12 = arith.constant dense<0.000000e+00> : vector<304xf32>
    %27 = vector.multi_reduction <add>, %26, %cst_12 [1] : vector<304x256xf32> to vector<304xf32>
    %28 = vector.shape_cast %27 : vector<304xf32> to vector<304x1xf32>
    %cst_13 = arith.constant 3.906250e-03 : f32
    %29 = vector.broadcast %cst_13 : f32 to vector<304x1xf32>
    %30 = arith.mulf %25, %29 : vector<304x1xf32>
    %cst_14 = arith.constant 3.906250e-03 : f32
    %31 = vector.broadcast %cst_14 : f32 to vector<304x1xf32>
    %32 = arith.mulf %28, %31 : vector<304x1xf32>
    %33 = arith.mulf %30, %30 : vector<304x1xf32>
    %34 = arith.subf %32, %33 : vector<304x1xf32>
    %cst_15 = arith.constant 0.000000e+00 : f32
    %35 = vector.broadcast %cst_15 : f32 to vector<304x1xf32>
    %36 = arith.maximumf %34, %35 : vector<304x1xf32>
    %37 = vector.broadcast %30 : vector<304x1xf32> to vector<304x256xf32>
    %38 = arith.subf %23, %37 : vector<304x256xf32>
    %cst_16 = arith.constant 9.99999974E-6 : f32
    %39 = vector.broadcast %cst_16 : f32 to vector<304x1xf32>
    %40 = arith.addf %36, %39 : vector<304x1xf32>
    %41 = math.rsqrt %40 : vector<304x1xf32>
    %42 = vector.broadcast %41 : vector<304x1xf32> to vector<304x256xf32>
    %43 = arith.mulf %38, %42 : vector<304x256xf32>
    %44 = vector.broadcast %5 : vector<1x256xf32> to vector<304x256xf32>
    %45 = arith.mulf %43, %44 : vector<304x256xf32>
    %46 = vector.broadcast %6 : vector<1x256xf32> to vector<304x256xf32>
    %47 = arith.addf %45, %46 : vector<304x256xf32>
    %c0_17 = arith.constant 0 : index
    %c0_18 = arith.constant 0 : index
    %48 = vector.load %arg5[%c0_17, %c0_18] : memref<304x256xf32, #tpu.memory_space<vmem>>, vector<304x256xf32>
    tpu.vector_store %arg5[%c0_17, %c0_18], %47 {strides = array<i32>} : memref<304x256xf32, #tpu.memory_space<vmem>>, vector<304x256xf32>,
    return
  }
  func.func @transform_0(%arg0: i32) -> (i32, i32) {
    %c0_i32 = arith.constant 0 : i32
    %c0_i32_0 = arith.constant 0 : i32
    return %arg0, %c0_i32 : i32, i32
  }
  func.func @transform_1(%arg0: i32) -> (i32, i32) {
    %c0_i32 = arith.constant 0 : i32
    %c0_i32_0 = arith.constant 0 : i32
    %c0_i32_1 = arith.constant 0 : i32
    return %c0_i32, %c0_i32_0 : i32, i32
  }
  func.func @transform_2(%arg0: i32) -> (i32, i32) {
    %c0_i32 = arith.constant 0 : i32
    %c0_i32_0 = arith.constant 0 : i32
    %c0_i32_1 = arith.constant 0 : i32
    return %c0_i32, %c0_i32_0 : i32, i32
  }
  func.func @transform_3(%arg0: i32) -> (i32, i32) {
    %c0_i32 = arith.constant 0 : i32
    %c0_i32_0 = arith.constant 0 : i32
    %c0_i32_1 = arith.constant 0 : i32
    return %c0_i32, %c0_i32_0 : i32, i32
  }
  func.func @transform_4(%arg0: i32) -> (i32, i32) {
    %c0_i32 = arith.constant 0 : i32
    %c0_i32_0 = arith.constant 0 : i32
    return %arg0, %c0_i32 : i32, i32
  }
}

</mosaic_0001>

<llo_original>
// kernel: tpu_custom_call.1
$region0: #{tpu_custom_call.1}
  #allocation0 [shape = 'u32[]', space=smem, size = 0x4, offset = 0x4, fixed_abs, tag = 'smem constant byte address 0x4 - core index']
  #allocation1 [shape = 'u32[144,128]{1,0:T(1,128)}', space=vmem, size = 0x12000, scoped, tag = 'internal scratch']
  %s0 = inlined_call_operand.hbm [shape: f32[608,128], index: 0, kind: input, shape index: {}]
  %s1 = inlined_call_operand.hbm [shape: bf16[128,256], index: 1, kind: input, shape index: {}]
  %s2 = inlined_call_operand.hbm [shape: bf16[256,256], index: 2, kind: input, shape index: {}]
  %s3 = inlined_call_operand.hbm [shape: f32[4,256], index: 3, kind: input, shape index: {}]
  %s4 = inlined_call_operand.hbm [shape: f32[608,256], index: 4, kind: output, shape index: {}]
  %s5 = sld [smem:[#allocation0]]
  $region65: #{tpu_custom_call.1} parent=0
    _
  %s7 = ssub.s32 1, %s5
  %s8 = scalar_select 0, %s7, %s5
  $region1: #{tpu_custom_call.1} parent=0
    #allocation2 [shape = 'u8[311296]{0}', space=vmem, size = 0x4c000, scoped, tag = 'input window, operand 0']
    #allocation3 [shape = 's32[2]{0}', space=sflag, size = 0x8, scoped, tag = 'scoped memory for tpu_custom_call.1']
    #allocation4 [shape = 's32[2]{0}', space=sflag, size = 0x8, scoped, tag = 'scoped memory for tpu_custom_call.1']
    #allocation5 [shape = 'u8[65536]{0}', space=vmem, size = 0x10000, scoped, tag = 'input window, operand 1, single buffered']
    #allocation6 [shape = 's32[1]{0}', space=sflag, size = 0x4, scoped, tag = 'scoped memory for tpu_custom_call.1']
    #allocation7 [shape = 'u8[131072]{0}', space=vmem, size = 0x20000, scoped, tag = 'input window, operand 2, single buffered']
    #allocation8 [shape = 'u8[4096]{0}', space=vmem, size = 0x1000, scoped, tag = 'input window, operand 3, single buffered']
    #allocation9 [shape = 's32[1]{0}', space=sflag, size = 0x4, scoped, tag = 'scoped memory for tpu_custom_call.1']
    #allocation10 [shape = 'u8[622592]{0}', space=vmem, size = 0x98000, scoped, tag = 'output window, operand 0']
    %9 = vsyncpa [#allocation3], 0
    %s10 = scalar_lea.sflag [#allocation3], 1
    %11 = vsyncpa %s10, 0
    %12 = vsyncpa [#allocation6], 0
    %13 = vsyncpa [#allocation9], 0
    %14 = vsyncpa [#allocation4], 0
    %s15 = scalar_lea.sflag [#allocation4], 1
    %16 = vsyncpa %s15, 0
    loop: start=0, step=1, limit=4
    $region2: #{tpu_custom_call.1} parent=1 // loop_pre_header
      _
    $region3: #{tpu_custom_call.1} parent=1 // loop_header
      %s18 = sphi 0, %s22
      %p19 = scmp.ge.s32.totalorder %s18, 4
      %s28 = sphi 0, %s30
      %s31 = sphi 0, %s28
      %s32 = sphi 0, %s31
      %s48 = sphi 0, %s32
      %s52 = sphi 0, %s52
      %s54 = sphi 0, %s52
      %s55 = sphi 0, %s54
      %s69 = sphi 0, %s55
      %s73 = sphi 0, %s73
      %s75 = sphi 0, %s73
      %s76 = sphi 0, %s75
      %s90 = sphi 0, %s76
      %s94 = sphi 0, %s94
      %s96 = sphi 0, %s94
      %s97 = sphi 0, %s96
      %s111 = sphi 0, %s97
      %s117 = sphi 0, %s119
      %s120 = sphi 0, %s117
      %s121 = sphi 0, %s120
      %s137 = sphi 0, %s121
    $region4: #{tpu_custom_call.1} parent=1 // loop_header_branch
      %21 = sbr.rel (%p19) target = $region8
    $region5: #{tpu_custom_call.1} parent=1 // loop_body
      %s23 = ssub.s32 %s18, 1
      %s24 = ssub.s32 %s18, 2
      %s25 = sadd.s32 %s18, 1
      %s26 = ssub.s32 %s18, %s25
      %p27 = scmp.eq.s32.totalorder %s26, 0
      %s29 = sadd.s32 %s28, 1
      %s30 = scalar_select %p27, %s28, %s29
      %p33 = pneg %p27
      %p34 = scmp.eq.s32.totalorder %s18, 1
      %p35 = por %p33, %p34
      %p36 = scmp.ne.s32.totalorder %s28, %s31
      %p37 = scmp.eq.s32.totalorder %s18, 0
      %p38 = por %p36, %p37
      %p39 = scmp.ne.s32.totalorder %s28, %s31
      %p40 = scmp.eq.s32.totalorder %s23, 1
      %p41 = por %p39, %p40
      %p42 = scmp.ne.s32.totalorder %s31, %s32
      %p43 = scmp.eq.s32.totalorder %s23, 0
      %p44 = por %p42, %p43
      %p45 = scmp.ne.s32.totalorder %s31, %s32
      %p46 = scmp.eq.s32.totalorder %s24, 1
      %p47 = por %p45, %p46
      %p49 = scmp.ne.s32.totalorder %s32, %s48
      %p50 = scmp.eq.s32.totalorder %s24, 0
      %p51 = por %p49, %p50
      %s53 = sadd.s32 %s52, 1
      %p56 = scmp.eq.s32.totalorder %s18, 1
      %p57 = scmp.ne.s32.totalorder %s52, %s54
      %p58 = scmp.eq.s32.totalorder %s18, 0
      %p59 = por %p57, %p58
      %p60 = scmp.ne.s32.totalorder %s52, %s54
      %p61 = scmp.eq.s32.totalorder %s23, 1
      %p62 = por %p60, %p61
      %p63 = scmp.ne.s32.totalorder %s54, %s55
      %p64 = scmp.eq.s32.totalorder %s23, 0
      %p65 = por %p63, %p64
      %p66 = scmp.ne.s32.totalorder %s54, %s55
      %p67 = scmp.eq.s32.totalorder %s24, 1
      %p68 = por %p66, %p67
      %p70 = scmp.ne.s32.totalorder %s55, %s69
      %p71 = scmp.eq.s32.totalorder %s24, 0
      %p72 = por %p70, %p71
      %s74 = sadd.s32 %s73, 1
      %p77 = scmp.eq.s32.totalorder %s18, 1
      %p78 = scmp.ne.s32.totalorder %s73, %s75
      %p79 = scmp.eq.s32.totalorder %s18, 0
      %p80 = por %p78, %p79
      %p81 = scmp.ne.s32.totalorder %s73, %s75
      %p82 = scmp.eq.s32.totalorder %s23, 1
      %p83 = por %p81, %p82
      %p84 = scmp.ne.s32.totalorder %s75, %s76
      %p85 = scmp.eq.s32.totalorder %s23, 0
      %p86 = por %p84, %p85
      %p87 = scmp.ne.s32.totalorder %s75, %s76
      %p88 = scmp.eq.s32.totalorder %s24, 1
      %p89 = por %p87, %p88
      %p91 = scmp.ne.s32.totalorder %s76, %s90
      %p92 = scmp.eq.s32.totalorder %s24, 0
      %p93 = por %p91, %p92
      %s95 = sadd.s32 %s94, 1
      %p98 = scmp.eq.s32.totalorder %s18, 1
      %p99 = scmp.ne.s32.totalorder %s94, %s96
      %p100 = scmp.eq.s32.totalorder %s18, 0
      %p101 = por %p99, %p100
      %p102 = scmp.ne.s32.totalorder %s94, %s96
      %p103 = scmp.eq.s32.totalorder %s23, 1
      %p104 = por %p102, %p103
      %p105 = scmp.ne.s32.totalorder %s96, %s97
      %p106 = scmp.eq.s32.totalorder %s23, 0
      %p107 = por %p105, %p106
      %p108 = scmp.ne.s32.totalorder %s96, %s97
      %p109 = scmp.eq.s32.totalorder %s24, 1
      %p110 = por %p108, %p109
      %p112 = scmp.ne.s32.totalorder %s97, %s111
      %p113 = scmp.eq.s32.totalorder %s24, 0
      %p114 = por %p112, %p113
      %s115 = ssub.s32 %s18, %s25
      %p116 = scmp.eq.s32.totalorder %s115, 0
      %s118 = sadd.s32 %s117, 1
      %s119 = scalar_select %p116, %s117, %s118
      %p122 = pneg %p116
      %p123 = scmp.eq.s32.totalorder %s18, 1
      %p124 = por %p122, %p123
      %p125 = scmp.ne.s32.totalorder %s117, %s120
      %p126 = scmp.eq.s32.totalorder %s18, 0
      %p127 = por %p125, %p126
      %p128 = scmp.ne.s32.totalorder %s117, %s120
      %p129 = scmp.eq.s32.totalorder %s23, 1
      %p130 = por %p128, %p129
      %p131 = scmp.ne.s32.totalorder %s120, %s121
      %p132 = scmp.eq.s32.totalorder %s23, 0
      %p133 = por %p131, %p132
      %p134 = scmp.ne.s32.totalorder %s120, %s121
      %p135 = scmp.eq.s32.totalorder %s24, 1
      %p136 = por %p134, %p135
      %p138 = scmp.ne.s32.totalorder %s121, %s137
      %p139 = scmp.eq.s32.totalorder %s24, 0
      %p140 = por %p138, %p139
      %p141 = scmp.le.s32.totalorder 1, %s18
      %p142 = scmp.lt.s32.totalorder %s18, 3
      %p143 = pnand %p141, %p142
      %p144 = pneg %p143
      // Predicated region
      $region9: #{tpu_custom_call.1} parent=5 // pred_check
        _
      $region10: #{tpu_custom_call.1} parent=5 // pred_check_branch
        %146 = sbr.rel (%p143) target = $region12
      $region11: #{tpu_custom_call.1} parent=5 // pred_region
        %s147 = ssub.s32 %s18, 1
        // Predicated region
        $region13: #{tpu_custom_call.1} parent=11 // pred_check
          %p148 = pneg %p65
        $region14: #{tpu_custom_call.1} parent=11 // pred_check_branch
          %150 = sbr.rel (%p148) target = $region16
        $region15: #{tpu_custom_call.1} parent=11 // pred_region
          %s152 = ssub.s32 2048, 2048
          %153 = vsyncadd [#allocation6], %s152
          %s154 = sshll.u32 [#allocation5], 4
          %s155 = int_to_ptr.vmem [resolvable:$true] %s154
          %160 = dma.hbm_to_vmem [thread:$0]  %s1, 2048, %s155, [#allocation6], 128, 128, 8
        $region16: #{tpu_custom_call.1} parent=11 // pred_fallthru
          _
        // Predicated region
        $region17: #{tpu_custom_call.1} parent=11 // pred_check
          %p161 = pneg %p86
        $region18: #{tpu_custom_call.1} parent=11 // pred_check_branch
          %163 = sbr.rel (%p161) target = $region20
        $region19: #{tpu_custom_call.1} parent=11 // pred_region
          %s165 = ssub.s32 4096, 4096
          %166 = vsyncadd [#allocation6], %s165
          %s167 = sshll.u32 [#allocation7], 4
          %s168 = int_to_ptr.vmem [resolvable:$true] %s167
          %173 = dma.hbm_to_vmem [thread:$0]  %s2, 4096, %s168, [#allocation6], 128, 128, 8
        $region20: #{tpu_custom_call.1} parent=11 // pred_fallthru
          _
        // Predicated region
        $region21: #{tpu_custom_call.1} parent=11 // pred_check
          %p174 = pneg %p107
        $region22: #{tpu_custom_call.1} parent=11 // pred_check_branch
          %176 = sbr.rel (%p174) target = $region24
        $region23: #{tpu_custom_call.1} parent=11 // pred_region
          %s178 = ssub.s32 128, 128
          %179 = vsyncadd [#allocation9], %s178
          %s181 = sshll.u32 [#allocation8], 4
          %s182 = int_to_ptr.vmem [resolvable:$true] %s181
          %184 = dma.hbm_to_vmem [thread:$0]  %s3, 128, %s182, [#allocation9]
        $region24: #{tpu_custom_call.1} parent=11 // pred_fallthru
          _
      $region12: #{tpu_custom_call.1} parent=5 // pred_fallthru
        _
      %p185 = scmp.lt.s32.totalorder %s18, 2
      // Predicated region
      $region25: #{tpu_custom_call.1} parent=5 // pred_check
        %p186 = pneg %p185
      $region26: #{tpu_custom_call.1} parent=5 // pred_check_branch
        %188 = sbr.rel (%p186) target = $region28
      $region27: #{tpu_custom_call.1} parent=5 // pred_region
        // Predicated region
        $region29: #{tpu_custom_call.1} parent=27 // pred_check
          %p189 = pneg %p38
        $region30: #{tpu_custom_call.1} parent=27 // pred_check_branch
          %191 = sbr.rel (%p189) target = $region32
        $region31: #{tpu_custom_call.1} parent=27 // pred_region
          %s192 = sand.u32 %s28, 1
          %s193 = scalar_lea.sflag [#allocation3], %s192
          %s194 = sand.u32 %s28, 1
          %s195 = smul.addr %s194, 304
          %s196 = scalar_lea.vmem [#allocation2], %s195
          %s197 = smul.u32 38, %s18
          %s199 = ssub.s32 4864, 4864
          %200 = vsyncadd %s193, %s199
          %s201 = smul.addr %s197, 128
          %s202 = scalar_lea.hbm %s0, %s201
          %s203 = sshll.u32 %s196, 4
          %s204 = int_to_ptr.vmem [resolvable:$true] %s203
          %209 = dma.hbm_to_vmem [thread:$0]  %s202, 4864, %s204, %s193, 128, 128, 8
        $region32: #{tpu_custom_call.1} parent=27 // pred_fallthru
          _
      $region28: #{tpu_custom_call.1} parent=5 // pred_fallthru
        _
      %p210 = scmp.le.s32.totalorder 1, %s18
      %p211 = scmp.lt.s32.totalorder %s18, 3
      %p212 = pnand %p210, %p211
      %p213 = pneg %p212
      // Predicated region
      $region33: #{tpu_custom_call.1} parent=5 // pred_check
        _
      $region34: #{tpu_custom_call.1} parent=5 // pred_check_branch
        %215 = sbr.rel (%p212) target = $region36
      $region35: #{tpu_custom_call.1} parent=5 // pred_region
        %s216 = ssub.s32 %s18, 1
        %s217 = sand.u32 %s31, 1
        %s218 = scalar_lea.sflag [#allocation3], %s217
        %s219 = sand.u32 %s31, 1
        %s220 = smul.addr %s219, 304
        %s221 = scalar_lea.vmem [#allocation2], %s220
        // Predicated region
        $region37: #{tpu_custom_call.1} parent=35 // pred_check
          %p222 = pneg %p44
        $region38: #{tpu_custom_call.1} parent=35 // pred_check_branch
          %224 = sbr.rel (%p222) target = $region40
        $region39: #{tpu_custom_call.1} parent=35 // pred_region
          %225 = dma.done %s218, 4864
        $region40: #{tpu_custom_call.1} parent=35 // pred_fallthru
          _
        // Predicated region
        $region41: #{tpu_custom_call.1} parent=35 // pred_check
          %p226 = pneg %p65
        $region42: #{tpu_custom_call.1} parent=35 // pred_check_branch
          %228 = sbr.rel (%p226) target = $region44
        $region43: #{tpu_custom_call.1} parent=35 // pred_region
          %229 = dma.done [#allocation6], 2048
        $region44: #{tpu_custom_call.1} parent=35 // pred_fallthru
          _
        // Predicated region
        $region45: #{tpu_custom_call.1} parent=35 // pred_check
          %p230 = pneg %p86
        $region46: #{tpu_custom_call.1} parent=35 // pred_check_branch
          %232 = sbr.rel (%p230) target = $region48
        $region47: #{tpu_custom_call.1} parent=35 // pred_region
          %233 = dma.done [#allocation6], 4096
        $region48: #{tpu_custom_call.1} parent=35 // pred_fallthru
          _
        // Predicated region
        $region49: #{tpu_custom_call.1} parent=35 // pred_check
          %p234 = pneg %p107
        $region50: #{tpu_custom_call.1} parent=35 // pred_check_branch
          %236 = sbr.rel (%p234) target = $region52
        $region51: #{tpu_custom_call.1} parent=35 // pred_region
          %237 = dma.done [#allocation9], 128
        $region52: #{tpu_custom_call.1} parent=35 // pred_fallthru
          _
        %s238 = sand.u32 %s31, 1
        %s239 = scalar_lea.sflag [#allocation3], %s238
        %s240 = sand.u32 %s31, 1
        %s241 = smul.addr %s240, 304
        %s242 = scalar_lea.vmem [#allocation2], %s241
        %p243 = pneg %p44
        %p244 = pneg %p41
        %p245 = pneg %p65
        %p246 = pneg %p62
        %p247 = pneg %p86
        %p248 = pneg %p83
        %p249 = pneg %p107
        %p250 = pneg %p104
        %p251 = pneg %p133
        %p252 = pneg %p130
        %s253 = sand.u32 %s120, 1
        %s254 = scalar_lea.sflag [#allocation4], %s253
        %s255 = sand.u32 %s120, 1
        %s256 = smul.addr %s255, 608
        %s257 = scalar_lea.vmem [#allocation10], %s256
        %s258 = smul.u32 38, %s23
        %s259 = smul.u32 38, %s23
        %v261 = vld [vmem:[%s221] sm:$0xff]
        %v262 = vld [vmem:[%s221 + $0x8] sm:$0xff]
        %v263 = vld [vmem:[%s221 + $0x10] sm:$0xff]
        %v264 = vld [vmem:[%s221 + $0x18] sm:$0xff]
        %v265 = vld [vmem:[%s221 + $0x20] sm:$0xff]
        %v266 = vld [vmem:[%s221 + $0x28] sm:$0xff]
        %v267 = vld [vmem:[%s221 + $0x30] sm:$0xff]
        %v268 = vld [vmem:[%s221 + $0x38] sm:$0xff]
        %v269 = vld [vmem:[%s221 + $0x40] sm:$0xff]
        %v270 = vld [vmem:[%s221 + $0x48] sm:$0xff]
        %v271 = vld [vmem:[%s221 + $0x50] sm:$0xff]
        %v272 = vld [vmem:[%s221 + $0x58] sm:$0xff]
        %v273 = vld [vmem:[%s221 + $0x60] sm:$0xff]
        %v274 = vld [vmem:[%s221 + $0x68] sm:$0xff]
        %v275 = vld [vmem:[%s221 + $0x70] sm:$0xff]
        %v276 = vld [vmem:[%s221 + $0x78] sm:$0xff]
        %v277 = vld [vmem:[%s221 + $0x80] sm:$0xff]
        %v278 = vld [vmem:[%s221 + $0x88] sm:$0xff]
        %v279 = vld [vmem:[%s221 + $0x90] sm:$0xff]
        %v280 = vld [vmem:[%s221 + $0x98] sm:$0xff]
        %v281 = vld [vmem:[%s221 + $0xa0] sm:$0xff]
        %v282 = vld [vmem:[%s221 + $0xa8] sm:$0xff]
        %v283 = vld [vmem:[%s221 + $0xb0] sm:$0xff]
        %v284 = vld [vmem:[%s221 + $0xb8] sm:$0xff]
        %v285 = vld [vmem:[%s221 + $0xc0] sm:$0xff]
        %v286 = vld [vmem:[%s221 + $0xc8] sm:$0xff]
        %v287 = vld [vmem:[%s221 + $0xd0] sm:$0xff]
        %v288 = vld [vmem:[%s221 + $0xd8] sm:$0xff]
        %v289 = vld [vmem:[%s221 + $0xe0] sm:$0xff]
        %v290 = vld [vmem:[%s221 + $0xe8] sm:$0xff]
        %v291 = vld [vmem:[%s221 + $0xf0] sm:$0xff]
        %v292 = vld [vmem:[%s221 + $0xf8] sm:$0xff]
        %v293 = vld [vmem:[%s221 + $0x100] sm:$0xff]
        %v294 = vld [vmem:[%s221 + $0x108] sm:$0xff]
        %v295 = vld [vmem:[%s221 + $0x110] sm:$0xff]
        %v296 = vld [vmem:[%s221 + $0x118] sm:$0xff]
        %v297 = vld [vmem:[%s221 + $0x120] sm:$0xff]
        %v298 = vld [vmem:[%s221 + $0x128] sm:$0xff]
        %v299 = vpack.c.bf16 %v262, %v261
        %v300 = vpack.c.bf16 %v264, %v263
        %v301 = vpack.c.bf16 %v266, %v265
        %v302 = vpack.c.bf16 %v268, %v267
        %v303 = vpack.c.bf16 %v270, %v269
        %v304 = vpack.c.bf16 %v272, %v271
        %v305 = vpack.c.bf16 %v274, %v273
        %v306 = vpack.c.bf16 %v276, %v275
        %v307 = vpack.c.bf16 %v278, %v277
        %v308 = vpack.c.bf16 %v280, %v279
        %v309 = vpack.c.bf16 %v282, %v281
        %v310 = vpack.c.bf16 %v284, %v283
        %v311 = vpack.c.bf16 %v286, %v285
        %v312 = vpack.c.bf16 %v288, %v287
        %v313 = vpack.c.bf16 %v290, %v289
        %v314 = vpack.c.bf16 %v292, %v291
        %v315 = vpack.c.bf16 %v294, %v293
        %v316 = vpack.c.bf16 %v296, %v295
        %v317 = vpack.c.bf16 %v298, %v297
        %v318 = vld [vmem:[#allocation8] sm:$0xff]
        %v319 = vld [vmem:[#allocation5] sm:$0xff]
        %v320 = vld [vmem:[#allocation5 + $0x8] sm:$0xff]
        %v321 = vld [vmem:[#allocation5 + $0x10] sm:$0xff]
        %v322 = vld [vmem:[#allocation5 + $0x18] sm:$0xff]
        %v323 = vld [vmem:[#allocation5 + $0x20] sm:$0xff]
        %v324 = vld [vmem:[#allocation5 + $0x28] sm:$0xff]
        %v325 = vld [vmem:[#allocation5 + $0x30] sm:$0xff]
        %v326 = vld [vmem:[#allocation5 + $0x38] sm:$0xff]
        %v327 = vld [vmem:[#allocation5 + $0x40] sm:$0xff]
        %v328 = vld [vmem:[#allocation5 + $0x48] sm:$0xff]
        %v329 = vld [vmem:[#allocation5 + $0x50] sm:$0xff]
        %v330 = vld [vmem:[#allocation5 + $0x58] sm:$0xff]
        %v331 = vld [vmem:[#allocation5 + $0x60] sm:$0xff]
        %v332 = vld [vmem:[#allocation5 + $0x68] sm:$0xff]
        %v333 = vld [vmem:[#allocation5 + $0x70] sm:$0xff]
        %v334 = vld [vmem:[#allocation5 + $0x78] sm:$0xff]
        %v336 = vlaneseq
        %v337 = vshrl.u32 %v336, 7
        %v338 = vsub.s32 0, %v337
        %v339 = vrot.slane %v318, %v338
        %v340 = vlaneseq
        %v341 = vshrl.u32 %v340, 7
        %v342 = vsub.s32 4, %v341
        %v343 = vrot.slane %v318, %v342
        %v346 = vlaneseq
        %v347 = vshrl.u32 %v346, 7
        %v348 = vsub.s32 0, %v347
        %v349 = vrot.slane %v339, %v348
        %v350 = vlaneseq
        %v351 = vshrl.u32 %v350, 7
        %v352 = vsub.s32 0, %v351
        %v353 = vrot.slane %v343, %v352
        %v370 = vunpack.c.l.b16 %v319
        %v371 = vunpack.c.h.b16 %v319
        %v372 = vunpack.c.l.b16 %v320
        %v373 = vunpack.c.h.b16 %v320
        %v374 = vunpack.c.l.b16 %v321
        %v375 = vunpack.c.h.b16 %v321
        %v376 = vunpack.c.l.b16 %v322
        %v377 = vunpack.c.h.b16 %v322
        %v378 = vunpack.c.l.b16 %v323
        %v379 = vunpack.c.h.b16 %v323
        %v380 = vunpack.c.l.b16 %v324
        %v381 = vunpack.c.h.b16 %v324
        %v382 = vunpack.c.l.b16 %v325
        %v383 = vunpack.c.h.b16 %v325
        %v384 = vunpack.c.l.b16 %v326
        %v385 = vunpack.c.h.b16 %v326
        %v386 = vunpack.c.l.b16 %v327
        %v387 = vunpack.c.h.b16 %v327
        %v388 = vunpack.c.l.b16 %v328
        %v389 = vunpack.c.h.b16 %v328
        %v390 = vunpack.c.l.b16 %v329
        %v391 = vunpack.c.h.b16 %v329
        %v392 = vunpack.c.l.b16 %v330
        %v393 = vunpack.c.h.b16 %v330
        %v394 = vunpack.c.l.b16 %v331
        %v395 = vunpack.c.h.b16 %v331
        %v396 = vunpack.c.l.b16 %v332
        %v397 = vunpack.c.h.b16 %v332
        %v398 = vunpack.c.l.b16 %v333
        %v399 = vunpack.c.h.b16 %v333
        %v400 = vunpack.c.l.b16 %v334
        %v401 = vunpack.c.h.b16 %v334
        %v402 = vpack.c.b16 %v372, %v370
        %v403 = vpack.c.b16 %v373, %v371
        %v404 = vpack.c.b16 %v376, %v374
        %v405 = vpack.c.b16 %v377, %v375
        %v406 = vpack.c.b16 %v380, %v378
        %v407 = vpack.c.b16 %v381, %v379
        %v408 = vpack.c.b16 %v384, %v382
        %v409 = vpack.c.b16 %v385, %v383
        %v410 = vpack.c.b16 %v388, %v386
        %v411 = vpack.c.b16 %v389, %v387
        %v412 = vpack.c.b16 %v392, %v390
        %v413 = vpack.c.b16 %v393, %v391
        %v414 = vpack.c.b16 %v396, %v394
        %v415 = vpack.c.b16 %v397, %v395
        %v416 = vpack.c.b16 %v400, %v398
        %v417 = vpack.c.b16 %v401, %v399
        %434 = vmatprep.subr.bf16.mxu0 %v417
        %435 = vmatpush1.bf16.msra.mxu0 %v416
        %436 = vmatprep.subr.bf16.mxu0 %v415
        %437 = vmatpush1.bf16.msra.mxu0 %v414
        %438 = vmatprep.subr.bf16.mxu0 %v413
        %439 = vmatpush1.bf16.msra.mxu0 %v412
        %440 = vmatprep.subr.bf16.mxu0 %v411
        %441 = vmatpush1.bf16.msra.mxu0 %v410
        %442 = vmatprep.subr.bf16.mxu0 %v409
        %443 = vmatpush1.bf16.msra.mxu0 %v408
        %444 = vmatprep.subr.bf16.mxu0 %v407
        %445 = vmatpush1.bf16.msra.mxu0 %v406
        %446 = vmatprep.subr.bf16.mxu0 %v405
        %447 = vmatpush1.bf16.msra.mxu0 %v404
        %448 = vmatprep.subr.bf16.mxu0 %v403
        %449 = vmatpush1.bf16.msra.mxu0 %v402
        %450 = vmatprep.subr.bf16.mxu0 0
        %451 = vmatpush2.bf16.msra.mxu0 0
        %452 = vmatprep.subr.bf16.mxu0 0
        %453 = vmatpush2.bf16.msra.mxu0 0
        %454 = vmatprep.subr.bf16.mxu0 0
        %455 = vmatpush2.bf16.msra.mxu0 0
        %456 = vmatprep.subr.bf16.mxu0 0
        %457 = vmatpush2.bf16.msra.mxu0 0
        %458 = vmatprep.subr.bf16.mxu0 0
        %459 = vmatpush2.bf16.msra.mxu0 0
        %460 = vmatprep.subr.bf16.mxu0 0
        %461 = vmatpush2.bf16.msra.mxu0 0
        %462 = vmatprep.subr.bf16.mxu0 0
        %463 = vmatpush2.bf16.msra.mxu0 0
        %464 = vmatprep.subr.bf16.mxu0 0
        %465 = vmatpush2.bf16.msra.mxu0 0
        %466 = vmatprep.mubr.bf16.mxu0 0
        %467 = vmatmul.mubr.bf16.gmra.mxu0 %v299
        %v468 = vpop.f32.mrf.mxu0
        %v469 = vadd.f32 %v349, %v468
        %v470 = vpop.f32.mrf.mxu0
        %v471 = vadd.f32 %v353, %v470
        %v472 = vpop.f32.mrf.mxu0
        %v473 = vadd.f32 %v349, %v472
        %v474 = vpop.f32.mrf.mxu0
        %v475 = vadd.f32 %v353, %v474
        %476 = vmatprep.mubr.bf16.mxu0 0
        %477 = vmatmul.mubr.bf16.gmra.mxu0 %v300
        %v478 = vpop.f32.mrf.mxu0
        %v479 = vadd.f32 %v349, %v478
        %v480 = vpop.f32.mrf.mxu0
        %v481 = vadd.f32 %v353, %v480
        %v482 = vpop.f32.mrf.mxu0
        %v483 = vadd.f32 %v349, %v482
        %v484 = vpop.f32.mrf.mxu0
        %v485 = vadd.f32 %v353, %v484
        %486 = vmatprep.mubr.bf16.mxu0 0
        %487 = vmatmul.mubr.bf16.gmra.mxu0 %v301
        %v488 = vpop.f32.mrf.mxu0
        %v489 = vadd.f32 %v349, %v488
        %v490 = vpop.f32.mrf.mxu0
        %v491 = vadd.f32 %v353, %v490
        %v492 = vpop.f32.mrf.mxu0
        %v493 = vadd.f32 %v349, %v492
        %v494 = vpop.f32.mrf.mxu0
        %v495 = vadd.f32 %v353, %v494
        %496 = vmatprep.mubr.bf16.mxu0 0
        %497 = vmatmul.mubr.bf16.gmra.mxu0 %v302
        %v498 = vpop.f32.mrf.mxu0
        %v499 = vadd.f32 %v349, %v498
        %v500 = vpop.f32.mrf.mxu0
        %v501 = vadd.f32 %v353, %v500
        %v502 = vpop.f32.mrf.mxu0
        %v503 = vadd.f32 %v349, %v502
        %v504 = vpop.f32.mrf.mxu0
        %v505 = vadd.f32 %v353, %v504
        %506 = vmatprep.mubr.bf16.mxu0 0
        %507 = vmatmul.mubr.bf16.gmra.mxu0 %v303
        %v508 = vpop.f32.mrf.mxu0
        %v509 = vadd.f32 %v349, %v508
        %v510 = vpop.f32.mrf.mxu0
        %v511 = vadd.f32 %v353, %v510
        %v512 = vpop.f32.mrf.mxu0
        %v513 = vadd.f32 %v349, %v512
        %v514 = vpop.f32.mrf.mxu0
        %v515 = vadd.f32 %v353, %v514
        %516 = vmatprep.mubr.bf16.mxu0 0
        %517 = vmatmul.mubr.bf16.gmra.mxu0 %v304
        %v518 = vpop.f32.mrf.mxu0
        %v519 = vadd.f32 %v349, %v518
        %v520 = vpop.f32.mrf.mxu0
        %v521 = vadd.f32 %v353, %v520
        %v522 = vpop.f32.mrf.mxu0
        %v523 = vadd.f32 %v349, %v522
        %v524 = vpop.f32.mrf.mxu0
        %v525 = vadd.f32 %v353, %v524
        %526 = vmatprep.mubr.bf16.mxu0 0
        %527 = vmatmul.mubr.bf16.gmra.mxu0 %v305
        %v528 = vpop.f32.mrf.mxu0
        %v529 = vadd.f32 %v349, %v528
        %v530 = vpop.f32.mrf.mxu0
        %v531 = vadd.f32 %v353, %v530
        %v532 = vpop.f32.mrf.mxu0
        %v533 = vadd.f32 %v349, %v532
        %v534 = vpop.f32.mrf.mxu0
        %v535 = vadd.f32 %v353, %v534
        %536 = vmatprep.mubr.bf16.mxu0 0
        %537 = vmatmul.mubr.bf16.gmra.mxu0 %v306
        %v538 = vpop.f32.mrf.mxu0
        %v539 = vadd.f32 %v349, %v538
        %v540 = vpop.f32.mrf.mxu0
        %v541 = vadd.f32 %v353, %v540
        %v542 = vpop.f32.mrf.mxu0
        %v543 = vadd.f32 %v349, %v542
        %v544 = vpop.f32.mrf.mxu0
        %v545 = vadd.f32 %v353, %v544
        %546 = vmatprep.mubr.bf16.mxu0 0
        %547 = vmatmul.mubr.bf16.gmra.mxu0 %v307
        %v548 = vpop.f32.mrf.mxu0
        %v549 = vadd.f32 %v349, %v548
        %v550 = vpop.f32.mrf.mxu0
        %v551 = vadd.f32 %v353, %v550
        %v552 = vpop.f32.mrf.mxu0
        %v553 = vadd.f32 %v349, %v552
        %v554 = vpop.f32.mrf.mxu0
        %v555 = vadd.f32 %v353, %v554
        %556 = vmatprep.mubr.bf16.mxu0 0
        %557 = vmatmul.mubr.bf16.gmra.mxu0 %v308
        %v558 = vpop.f32.mrf.mxu0
        %v559 = vadd.f32 %v349, %v558
        %v560 = vpop.f32.mrf.mxu0
        %v561 = vadd.f32 %v353, %v560
        %v562 = vpop.f32.mrf.mxu0
        %v563 = vadd.f32 %v349, %v562
        %v564 = vpop.f32.mrf.mxu0
        %v565 = vadd.f32 %v353, %v564
        %566 = vmatprep.mubr.bf16.mxu0 0
        %567 = vmatmul.mubr.bf16.gmra.mxu0 %v309
        %v568 = vpop.f32.mrf.mxu0
        %v569 = vadd.f32 %v349, %v568
        %v570 = vpop.f32.mrf.mxu0
        %v571 = vadd.f32 %v353, %v570
        %v572 = vpop.f32.mrf.mxu0
        %v573 = vadd.f32 %v349, %v572
        %v574 = vpop.f32.mrf.mxu0
        %v575 = vadd.f32 %v353, %v574
        %576 = vmatprep.mubr.bf16.mxu0 0
        %577 = vmatmul.mubr.bf16.gmra.mxu0 %v310
        %v578 = vpop.f32.mrf.mxu0
        %v579 = vadd.f32 %v349, %v578
        %v580 = vpop.f32.mrf.mxu0
        %v581 = vadd.f32 %v353, %v580
        %v582 = vpop.f32.mrf.mxu0
        %v583 = vadd.f32 %v349, %v582
        %v584 = vpop.f32.mrf.mxu0
        %v585 = vadd.f32 %v353, %v584
        %586 = vmatprep.mubr.bf16.mxu0 0
        %587 = vmatmul.mubr.bf16.gmra.mxu0 %v311
        %v588 = vpop.f32.mrf.mxu0
        %v589 = vadd.f32 %v349, %v588
        %v590 = vpop.f32.mrf.mxu0
        %v591 = vadd.f32 %v353, %v590
        %v592 = vpop.f32.mrf.mxu0
        %v593 = vadd.f32 %v349, %v592
        %v594 = vpop.f32.mrf.mxu0
        %v595 = vadd.f32 %v353, %v594
        %596 = vmatprep.mubr.bf16.mxu0 0
        %597 = vmatmul.mubr.bf16.gmra.mxu0 %v312
        %v598 = vpop.f32.mrf.mxu0
        %v599 = vadd.f32 %v349, %v598
        %v600 = vpop.f32.mrf.mxu0
        %v601 = vadd.f32 %v353, %v600
        %v602 = vpop.f32.mrf.mxu0
        %v603 = vadd.f32 %v349, %v602
        %v604 = vpop.f32.mrf.mxu0
        %v605 = vadd.f32 %v353, %v604
        %606 = vmatprep.mubr.bf16.mxu0 0
        %607 = vmatmul.mubr.bf16.gmra.mxu0 %v313
        %v608 = vpop.f32.mrf.mxu0
        %v609 = vadd.f32 %v349, %v608
        %v610 = vpop.f32.mrf.mxu0
        %v611 = vadd.f32 %v353, %v610
        %v612 = vpop.f32.mrf.mxu0
        %v613 = vadd.f32 %v349, %v612
        %v614 = vpop.f32.mrf.mxu0
        %v615 = vadd.f32 %v353, %v614
        %616 = vmatprep.mubr.bf16.mxu0 0
        %617 = vmatmul.mubr.bf16.gmra.mxu0 %v314
        %v618 = vpop.f32.mrf.mxu0
        %v619 = vadd.f32 %v349, %v618
        %v620 = vpop.f32.mrf.mxu0
        %v621 = vadd.f32 %v353, %v620
        %v622 = vpop.f32.mrf.mxu0
        %v623 = vadd.f32 %v349, %v622
        %v624 = vpop.f32.mrf.mxu0
        %v625 = vadd.f32 %v353, %v624
        %626 = vmatprep.mubr.bf16.mxu0 0
        %627 = vmatmul.mubr.bf16.gmra.mxu0 %v315
        %v628 = vpop.f32.mrf.mxu0
        %v629 = vadd.f32 %v349, %v628
        %v630 = vpop.f32.mrf.mxu0
        %v631 = vadd.f32 %v353, %v630
        %v632 = vpop.f32.mrf.mxu0
        %v633 = vadd.f32 %v349, %v632
        %v634 = vpop.f32.mrf.mxu0
        %v635 = vadd.f32 %v353, %v634
        %636 = vmatprep.mubr.bf16.mxu0 0
        %637 = vmatmul.mubr.bf16.gmra.mxu0 %v316
        %v638 = vpop.f32.mrf.mxu0
        %v639 = vadd.f32 %v349, %v638
        %v640 = vpop.f32.mrf.mxu0
        %v641 = vadd.f32 %v353, %v640
        %v642 = vpop.f32.mrf.mxu0
        %v643 = vadd.f32 %v349, %v642
        %v644 = vpop.f32.mrf.mxu0
        %v645 = vadd.f32 %v353, %v644
        %646 = vmatprep.mubr.bf16.mxu0 0
        %647 = vmatmul.mubr.bf16.gmra.mxu0 %v317
        %v648 = vpop.f32.mrf.mxu0
        %v649 = vadd.f32 %v349, %v648
        %v650 = vpop.f32.mrf.mxu0
        %v651 = vadd.f32 %v353, %v650
        %v652 = vpop.f32.mrf.mxu0
        %v653 = vadd.f32 %v349, %v652
        %v654 = vpop.f32.mrf.mxu0
        %v655 = vadd.f32 %v353, %v654
        %656 = vdwg.mxu0
        %v657 = vmul.f32 %v469, 0.5
        %v658 = vmul.f32 %v471, 0.5
        %v659 = vmul.f32 %v473, 0.5
        %v660 = vmul.f32 %v475, 0.5
        %v661 = vmul.f32 %v479, 0.5
        %v662 = vmul.f32 %v481, 0.5
        %v663 = vmul.f32 %v483, 0.5
        %v664 = vmul.f32 %v485, 0.5
        %v665 = vmul.f32 %v489, 0.5
        %v666 = vmul.f32 %v491, 0.5
        %v667 = vmul.f32 %v493, 0.5
        %v668 = vmul.f32 %v495, 0.5
        %v669 = vmul.f32 %v499, 0.5
        %v670 = vmul.f32 %v501, 0.5
        %v671 = vmul.f32 %v503, 0.5
        %v672 = vmul.f32 %v505, 0.5
        %v673 = vmul.f32 %v509, 0.5
        %v674 = vmul.f32 %v511, 0.5
        %v675 = vmul.f32 %v513, 0.5
        %v676 = vmul.f32 %v515, 0.5
        %v677 = vmul.f32 %v519, 0.5
        %v678 = vmul.f32 %v521, 0.5
        %v679 = vmul.f32 %v523, 0.5
        %v680 = vmul.f32 %v525, 0.5
        %v681 = vmul.f32 %v529, 0.5
        %v682 = vmul.f32 %v531, 0.5
        %v683 = vmul.f32 %v533, 0.5
        %v684 = vmul.f32 %v535, 0.5
        %v685 = vmul.f32 %v539, 0.5
        %v686 = vmul.f32 %v541, 0.5
        %v687 = vmul.f32 %v543, 0.5
        %v688 = vmul.f32 %v545, 0.5
        %v689 = vmul.f32 %v549, 0.5
        %v690 = vmul.f32 %v551, 0.5
        %v691 = vmul.f32 %v553, 0.5
        %v692 = vmul.f32 %v555, 0.5
        %v693 = vmul.f32 %v559, 0.5
        %v694 = vmul.f32 %v561, 0.5
        %v695 = vmul.f32 %v563, 0.5
        %v696 = vmul.f32 %v565, 0.5
        %v697 = vmul.f32 %v569, 0.5
        %v698 = vmul.f32 %v571, 0.5
        %v699 = vmul.f32 %v573, 0.5
        %v700 = vmul.f32 %v575, 0.5
        %v701 = vmul.f32 %v579, 0.5
        %v702 = vmul.f32 %v581, 0.5
        %v703 = vmul.f32 %v583, 0.5
        %v704 = vmul.f32 %v585, 0.5
        %v705 = vmul.f32 %v589, 0.5
        %v706 = vmul.f32 %v591, 0.5
        %v707 = vmul.f32 %v593, 0.5
        %v708 = vmul.f32 %v595, 0.5
        %v709 = vmul.f32 %v599, 0.5
        %v710 = vmul.f32 %v601, 0.5
        %v711 = vmul.f32 %v603, 0.5
        %v712 = vmul.f32 %v605, 0.5
        %v713 = vmul.f32 %v609, 0.5
        %v714 = vmul.f32 %v611, 0.5
        %v715 = vmul.f32 %v613, 0.5
        %v716 = vmul.f32 %v615, 0.5
        %v717 = vmul.f32 %v619, 0.5
        %v718 = vmul.f32 %v621, 0.5
        %v719 = vmul.f32 %v623, 0.5
        %v720 = vmul.f32 %v625, 0.5
        %v721 = vmul.f32 %v629, 0.5
        %v722 = vmul.f32 %v631, 0.5
        %v723 = vmul.f32 %v633, 0.5
        %v724 = vmul.f32 %v635, 0.5
        %v725 = vmul.f32 %v639, 0.5
        %v726 = vmul.f32 %v641, 0.5
        %v727 = vmul.f32 %v643, 0.5
        %v728 = vmul.f32 %v645, 0.5
        %v729 = vmul.f32 %v649, 0.5
        %v730 = vmul.f32 %v651, 0.5
        %v731 = vmul.f32 %v653, 0.5
        %v732 = vmul.f32 %v655, 0.5
        %v733 = vmul.f32 %v469, 0.70710677
        %v734 = vmul.f32 %v471, 0.70710677
        %v735 = vmul.f32 %v473, 0.70710677
        %v736 = vmul.f32 %v475, 0.70710677
        %v737 = vmul.f32 %v479, 0.70710677
        %v738 = vmul.f32 %v481, 0.70710677
        %v739 = vmul.f32 %v483, 0.70710677
        %v740 = vmul.f32 %v485, 0.70710677
        %v741 = vmul.f32 %v489, 0.70710677
        %v742 = vmul.f32 %v491, 0.70710677
        %v743 = vmul.f32 %v493, 0.70710677
        %v744 = vmul.f32 %v495, 0.70710677
        %v745 = vmul.f32 %v499, 0.70710677
        %v746 = vmul.f32 %v501, 0.70710677
        %v747 = vmul.f32 %v503, 0.70710677
        %v748 = vmul.f32 %v505, 0.70710677
        %v749 = vmul.f32 %v509, 0.70710677
        %v750 = vmul.f32 %v511, 0.70710677
        %v751 = vmul.f32 %v513, 0.70710677
        %v752 = vmul.f32 %v515, 0.70710677
        %v753 = vmul.f32 %v519, 0.70710677
        %v754 = vmul.f32 %v521, 0.70710677
        %v755 = vmul.f32 %v523, 0.70710677
        %v756 = vmul.f32 %v525, 0.70710677
        %v757 = vmul.f32 %v529, 0.70710677
        %v758 = vmul.f32 %v531, 0.70710677
        %v759 = vmul.f32 %v533, 0.70710677
        %v760 = vmul.f32 %v535, 0.70710677
        %v761 = vmul.f32 %v539, 0.70710677
        %v762 = vmul.f32 %v541, 0.70710677
        %v763 = vmul.f32 %v543, 0.70710677
        %v764 = vmul.f32 %v545, 0.70710677
        %v765 = vmul.f32 %v549, 0.70710677
        %v766 = vmul.f32 %v551, 0.70710677
        %v767 = vmul.f32 %v553, 0.70710677
        %v768 = vmul.f32 %v555, 0.70710677
        %v769 = vmul.f32 %v559, 0.70710677
        %v770 = vmul.f32 %v561, 0.70710677
        %v771 = vmul.f32 %v563, 0.70710677
        %v772 = vmul.f32 %v565, 0.70710677
        %v773 = vmul.f32 %v569, 0.70710677
        %v774 = vmul.f32 %v571, 0.70710677
        %v775 = vmul.f32 %v573, 0.70710677
        %v776 = vmul.f32 %v575, 0.70710677
        %v777 = vmul.f32 %v579, 0.70710677
        %v778 = vmul.f32 %v581, 0.70710677
        %v779 = vmul.f32 %v583, 0.70710677
        %v780 = vmul.f32 %v585, 0.70710677
        %v781 = vmul.f32 %v589, 0.70710677
        %v782 = vmul.f32 %v591, 0.70710677
        %v783 = vmul.f32 %v593, 0.70710677
        %v784 = vmul.f32 %v595, 0.70710677
        %v785 = vmul.f32 %v599, 0.70710677
        %v786 = vmul.f32 %v601, 0.70710677
        %v787 = vmul.f32 %v603, 0.70710677
        %v788 = vmul.f32 %v605, 0.70710677
        %v789 = vmul.f32 %v609, 0.70710677
        %v790 = vmul.f32 %v611, 0.70710677
        %v791 = vmul.f32 %v613, 0.70710677
        %v792 = vmul.f32 %v615, 0.70710677
        %v793 = vmul.f32 %v619, 0.70710677
        %v794 = vmul.f32 %v621, 0.70710677
        %v795 = vmul.f32 %v623, 0.70710677
        %v796 = vmul.f32 %v625, 0.70710677
        %v797 = vmul.f32 %v629, 0.70710677
        %v798 = vmul.f32 %v631, 0.70710677
        %v799 = vmul.f32 %v633, 0.70710677
        %v800 = vmul.f32 %v635, 0.70710677
        %v801 = vmul.f32 %v639, 0.70710677
        %v802 = vmul.f32 %v641, 0.70710677
        %v803 = vmul.f32 %v643, 0.70710677
        %v804 = vmul.f32 %v645, 0.70710677
        %v805 = vmul.f32 %v649, 0.70710677
        %v806 = vmul.f32 %v651, 0.70710677
        %v807 = vmul.f32 %v653, 0.70710677
        %v808 = vmul.f32 %v655, 0.70710677
        %v809 = verf.f32.pop %v733
        %v810 = verf.f32.pop %v734
        %v811 = verf.f32.pop %v735
        %v812 = verf.f32.pop %v736
        %v813 = verf.f32.pop %v737
        %v814 = verf.f32.pop %v738
        %v815 = verf.f32.pop %v739
        %v816 = verf.f32.pop %v740
        %v817 = verf.f32.pop %v741
        %v818 = verf.f32.pop %v742
        %v819 = verf.f32.pop %v743
        %v820 = verf.f32.pop %v744
        %v821 = verf.f32.pop %v745
        %v822 = verf.f32.pop %v746
        %v823 = verf.f32.pop %v747
        %v824 = verf.f32.pop %v748
        %v825 = verf.f32.pop %v749
        %v826 = verf.f32.pop %v750
        %v827 = verf.f32.pop %v751
        %v828 = verf.f32.pop %v752
        %v829 = verf.f32.pop %v753
        %v830 = verf.f32.pop %v754
        %v831 = verf.f32.pop %v755
        %v832 = verf.f32.pop %v756
        %v833 = verf.f32.pop %v757
        %v834 = verf.f32.pop %v758
        %v835 = verf.f32.pop %v759
        %v836 = verf.f32.pop %v760
        %v837 = verf.f32.pop %v761
        %v838 = verf.f32.pop %v762
        %v839 = verf.f32.pop %v763
        %v840 = verf.f32.pop %v764
        %v841 = verf.f32.pop %v765
        %v842 = verf.f32.pop %v766
        %v843 = verf.f32.pop %v767
        %v844 = verf.f32.pop %v768
        %v845 = verf.f32.pop %v769
        %v846 = verf.f32.pop %v770
        %v847 = verf.f32.pop %v771
        %v848 = verf.f32.pop %v772
        %v849 = verf.f32.pop %v773
        %v850 = verf.f32.pop %v774
        %v851 = verf.f32.pop %v775
        %v852 = verf.f32.pop %v776
        %v853 = verf.f32.pop %v777
        %v854 = verf.f32.pop %v778
        %v855 = verf.f32.pop %v779
        %v856 = verf.f32.pop %v780
        %v857 = verf.f32.pop %v781
        %v858 = verf.f32.pop %v782
        %v859 = verf.f32.pop %v783
        %v860 = verf.f32.pop %v784
        %v861 = verf.f32.pop %v785
        %v862 = verf.f32.pop %v786
        %v863 = verf.f32.pop %v787
        %v864 = verf.f32.pop %v788
        %v865 = verf.f32.pop %v789
        %v866 = verf.f32.pop %v790
        %v867 = verf.f32.pop %v791
        %v868 = verf.f32.pop %v792
        %v869 = verf.f32.pop %v793
        %v870 = verf.f32.pop %v794
        %v871 = verf.f32.pop %v795
        %v872 = verf.f32.pop %v796
        %v873 = verf.f32.pop %v797
        %v874 = verf.f32.pop %v798
        %v875 = verf.f32.pop %v799
        %v876 = verf.f32.pop %v800
        %v877 = verf.f32.pop %v801
        %v878 = verf.f32.pop %v802
        %v879 = verf.f32.pop %v803
        %v880 = verf.f32.pop %v804
        %v881 = verf.f32.pop %v805
        %v882 = verf.f32.pop %v806
        %v883 = verf.f32.pop %v807
        %v884 = verf.f32.pop %v808
        %v885 = vadd.f32 %v809, 1.0
        %v886 = vadd.f32 %v810, 1.0
        %v887 = vadd.f32 %v811, 1.0
        %v888 = vadd.f32 %v812, 1.0
        %v889 = vadd.f32 %v813, 1.0
        %v890 = vadd.f32 %v814, 1.0
        %v891 = vadd.f32 %v815, 1.0
        %v892 = vadd.f32 %v816, 1.0
        %v893 = vadd.f32 %v817, 1.0
        %v894 = vadd.f32 %v818, 1.0
        %v895 = vadd.f32 %v819, 1.0
        %v896 = vadd.f32 %v820, 1.0
        %v897 = vadd.f32 %v821, 1.0
        %v898 = vadd.f32 %v822, 1.0
        %v899 = vadd.f32 %v823, 1.0
        %v900 = vadd.f32 %v824, 1.0
        %v901 = vadd.f32 %v825, 1.0
        %v902 = vadd.f32 %v826, 1.0
        %v903 = vadd.f32 %v827, 1.0
        %v904 = vadd.f32 %v828, 1.0
        %v905 = vadd.f32 %v829, 1.0
        %v906 = vadd.f32 %v830, 1.0
        %v907 = vadd.f32 %v831, 1.0
        %v908 = vadd.f32 %v832, 1.0
        %v909 = vadd.f32 %v833, 1.0
        %v910 = vadd.f32 %v834, 1.0
        %v911 = vadd.f32 %v835, 1.0
        %v912 = vadd.f32 %v836, 1.0
        %v913 = vadd.f32 %v837, 1.0
        %v914 = vadd.f32 %v838, 1.0
        %v915 = vadd.f32 %v839, 1.0
        %v916 = vadd.f32 %v840, 1.0
        %v917 = vadd.f32 %v841, 1.0
        %v918 = vadd.f32 %v842, 1.0
        %v919 = vadd.f32 %v843, 1.0
        %v920 = vadd.f32 %v844, 1.0
        %v921 = vadd.f32 %v845, 1.0
        %v922 = vadd.f32 %v846, 1.0
        %v923 = vadd.f32 %v847, 1.0
        %v924 = vadd.f32 %v848, 1.0
        %v925 = vadd.f32 %v849, 1.0
        %v926 = vadd.f32 %v850, 1.0
        %v927 = vadd.f32 %v851, 1.0
        %v928 = vadd.f32 %v852, 1.0
        %v929 = vadd.f32 %v853, 1.0
        %v930 = vadd.f32 %v854, 1.0
        %v931 = vadd.f32 %v855, 1.0
        %v932 = vadd.f32 %v856, 1.0
        %v933 = vadd.f32 %v857, 1.0
        %v934 = vadd.f32 %v858, 1.0
        %v935 = vadd.f32 %v859, 1.0
        %v936 = vadd.f32 %v860, 1.0
        %v937 = vadd.f32 %v861, 1.0
        %v938 = vadd.f32 %v862, 1.0
        %v939 = vadd.f32 %v863, 1.0
        %v940 = vadd.f32 %v864, 1.0
        %v941 = vadd.f32 %v865, 1.0
        %v942 = vadd.f32 %v866, 1.0
        %v943 = vadd.f32 %v867, 1.0
        %v944 = vadd.f32 %v868, 1.0
        %v945 = vadd.f32 %v869, 1.0
        %v946 = vadd.f32 %v870, 1.0
        %v947 = vadd.f32 %v871, 1.0
        %v948 = vadd.f32 %v872, 1.0
        %v949 = vadd.f32 %v873, 1.0
        %v950 = vadd.f32 %v874, 1.0
        %v951 = vadd.f32 %v875, 1.0
        %v952 = vadd.f32 %v876, 1.0
        %v953 = vadd.f32 %v877, 1.0
        %v954 = vadd.f32 %v878, 1.0
        %v955 = vadd.f32 %v879, 1.0
        %v956 = vadd.f32 %v880, 1.0
        %v957 = vadd.f32 %v881, 1.0
        %v958 = vadd.f32 %v882, 1.0
        %v959 = vadd.f32 %v883, 1.0
        %v960 = vadd.f32 %v884, 1.0
        %v961 = vmul.f32 %v657, %v885
        %v962 = vmul.f32 %v658, %v886
        %v963 = vmul.f32 %v659, %v887
        %v964 = vmul.f32 %v660, %v888
        %v965 = vmul.f32 %v661, %v889
        %v966 = vmul.f32 %v662, %v890
        %v967 = vmul.f32 %v663, %v891
        %v968 = vmul.f32 %v664, %v892
        %v969 = vmul.f32 %v665, %v893
        %v970 = vmul.f32 %v666, %v894
        %v971 = vmul.f32 %v667, %v895
        %v972 = vmul.f32 %v668, %v896
        %v973 = vmul.f32 %v669, %v897
        %v974 = vmul.f32 %v670, %v898
        %v975 = vmul.f32 %v671, %v899
        %v976 = vmul.f32 %v672, %v900
        %v977 = vmul.f32 %v673, %v901
        %v978 = vmul.f32 %v674, %v902
        %v979 = vmul.f32 %v675, %v903
        %v980 = vmul.f32 %v676, %v904
        %v981 = vmul.f32 %v677, %v905
        %v982 = vmul.f32 %v678, %v906
        %v983 = vmul.f32 %v679, %v907
        %v984 = vmul.f32 %v680, %v908
        %v985 = vmul.f32 %v681, %v909
        %v986 = vmul.f32 %v682, %v910
        %v987 = vmul.f32 %v683, %v911
        %v988 = vmul.f32 %v684, %v912
        %v989 = vmul.f32 %v685, %v913
        %v990 = vmul.f32 %v686, %v914
        %v991 = vmul.f32 %v687, %v915
        %v992 = vmul.f32 %v688, %v916
        %v993 = vmul.f32 %v689, %v917
        %v994 = vmul.f32 %v690, %v918
        %v995 = vmul.f32 %v691, %v919
        %v996 = vmul.f32 %v692, %v920
        %v997 = vmul.f32 %v693, %v921
        %v998 = vmul.f32 %v694, %v922
        %v999 = vmul.f32 %v695, %v923
        %v1000 = vmul.f32 %v696, %v924
        %v1001 = vmul.f32 %v697, %v925
        %v1002 = vmul.f32 %v698, %v926
        %v1003 = vmul.f32 %v699, %v927
        %v1004 = vmul.f32 %v700, %v928
        %v1005 = vmul.f32 %v701, %v929
        %v1006 = vmul.f32 %v702, %v930
        %v1007 = vmul.f32 %v703, %v931
        %v1008 = vmul.f32 %v704, %v932
        %v1009 = vmul.f32 %v705, %v933
        %v1010 = vmul.f32 %v706, %v934
        %v1011 = vmul.f32 %v707, %v935
        %v1012 = vmul.f32 %v708, %v936
        %v1013 = vmul.f32 %v709, %v937
        %v1014 = vmul.f32 %v710, %v938
        %v1015 = vmul.f32 %v711, %v939
        %v1016 = vmul.f32 %v712, %v940
        %v1017 = vmul.f32 %v713, %v941
        %v1018 = vmul.f32 %v714, %v942
        %v1019 = vmul.f32 %v715, %v943
        %v1020 = vmul.f32 %v716, %v944
        %v1021 = vmul.f32 %v717, %v945
        %v1022 = vmul.f32 %v718, %v946
        %v1023 = vmul.f32 %v719, %v947
        %v1024 = vmul.f32 %v720, %v948
        %v1025 = vmul.f32 %v721, %v949
        %v1026 = vmul.f32 %v722, %v950
        %v1027 = vmul.f32 %v723, %v951
        %v1028 = vmul.f32 %v724, %v952
        %v1029 = vmul.f32 %v725, %v953
        %v1030 = vmul.f32 %v726, %v954
        %v1031 = vmul.f32 %v727, %v955
        %v1032 = vmul.f32 %v728, %v956
        %v1033 = vmul.f32 %v729, %v957
        %v1034 = vmul.f32 %v730, %v958
        %v1035 = vmul.f32 %v731, %v959
        %v1036 = vmul.f32 %v732, %v960
        %v1037 = vpack.c.bf16 %v963, %v961
        %v1038 = vpack.c.bf16 %v964, %v962
        %v1039 = vpack.c.bf16 %v967, %v965
        %v1040 = vpack.c.bf16 %v968, %v966
        %v1041 = vpack.c.bf16 %v971, %v969
        %v1042 = vpack.c.bf16 %v972, %v970
        %v1043 = vpack.c.bf16 %v975, %v973
        %v1044 = vpack.c.bf16 %v976, %v974
        %v1045 = vpack.c.bf16 %v979, %v977
        %v1046 = vpack.c.bf16 %v980, %v978
        %v1047 = vpack.c.bf16 %v983, %v981
        %v1048 = vpack.c.bf16 %v984, %v982
        %v1049 = vpack.c.bf16 %v987, %v985
        %v1050 = vpack.c.bf16 %v988, %v986
        %v1051 = vpack.c.bf16 %v991, %v989
        %v1052 = vpack.c.bf16 %v992, %v990
        %v1053 = vpack.c.bf16 %v995, %v993
        %v1054 = vpack.c.bf16 %v996, %v994
        %v1055 = vpack.c.bf16 %v999, %v997
        %v1056 = vpack.c.bf16 %v1000, %v998
        %v1057 = vpack.c.bf16 %v1003, %v1001
        %v1058 = vpack.c.bf16 %v1004, %v1002
        %v1059 = vpack.c.bf16 %v1007, %v1005
        %v1060 = vpack.c.bf16 %v1008, %v1006
        %v1061 = vpack.c.bf16 %v1011, %v1009
        %v1062 = vpack.c.bf16 %v1012, %v1010
        %v1063 = vpack.c.bf16 %v1015, %v1013
        %v1064 = vpack.c.bf16 %v1016, %v1014
        %v1065 = vpack.c.bf16 %v1019, %v1017
        %v1066 = vpack.c.bf16 %v1020, %v1018
        %v1067 = vpack.c.bf16 %v1023, %v1021
        %v1068 = vpack.c.bf16 %v1024, %v1022
        %v1069 = vpack.c.bf16 %v1027, %v1025
        %v1070 = vpack.c.bf16 %v1028, %v1026
        %v1071 = vpack.c.bf16 %v1031, %v1029
        %v1072 = vpack.c.bf16 %v1032, %v1030
        %v1073 = vpack.c.bf16 %v1035, %v1033
        %v1074 = vpack.c.bf16 %v1036, %v1034
        %v1075 = vld [vmem:[#allocation7] sm:$0xff]
        %v1076 = vld [vmem:[#allocation7 + $0x8] sm:$0xff]
        %v1077 = vld [vmem:[#allocation7 + $0x10] sm:$0xff]
        %v1078 = vld [vmem:[#allocation7 + $0x18] sm:$0xff]
        %v1079 = vld [vmem:[#allocation7 + $0x20] sm:$0xff]
        %v1080 = vld [vmem:[#allocation7 + $0x28] sm:$0xff]
        %v1081 = vld [vmem:[#allocation7 + $0x30] sm:$0xff]
        %v1082 = vld [vmem:[#allocation7 + $0x38] sm:$0xff]
        %v1083 = vld [vmem:[#allocation7 + $0x40] sm:$0xff]
        %v1084 = vld [vmem:[#allocation7 + $0x48] sm:$0xff]
        %v1085 = vld [vmem:[#allocation7 + $0x50] sm:$0xff]
        %v1086 = vld [vmem:[#allocation7 + $0x58] sm:$0xff]
        %v1087 = vld [vmem:[#allocation7 + $0x60] sm:$0xff]
        %v1088 = vld [vmem:[#allocation7 + $0x68] sm:$0xff]
        %v1089 = vld [vmem:[#allocation7 + $0x70] sm:$0xff]
        %v1090 = vld [vmem:[#allocation7 + $0x78] sm:$0xff]
        %v1091 = vld [vmem:[#allocation7 + $0x80] sm:$0xff]
        %v1092 = vld [vmem:[#allocation7 + $0x88] sm:$0xff]
        %v1093 = vld [vmem:[#allocation7 + $0x90] sm:$0xff]
        %v1094 = vld [vmem:[#allocation7 + $0x98] sm:$0xff]
        %v1095 = vld [vmem:[#allocation7 + $0xa0] sm:$0xff]
        %v1096 = vld [vmem:[#allocation7 + $0xa8] sm:$0xff]
        %v1097 = vld [vmem:[#allocation7 + $0xb0] sm:$0xff]
        %v1098 = vld [vmem:[#allocation7 + $0xb8] sm:$0xff]
        %v1099 = vld [vmem:[#allocation7 + $0xc0] sm:$0xff]
        %v1100 = vld [vmem:[#allocation7 + $0xc8] sm:$0xff]
        %v1101 = vld [vmem:[#allocation7 + $0xd0] sm:$0xff]
        %v1102 = vld [vmem:[#allocation7 + $0xd8] sm:$0xff]
        %v1103 = vld [vmem:[#allocation7 + $0xe0] sm:$0xff]
        %v1104 = vld [vmem:[#allocation7 + $0xe8] sm:$0xff]
        %v1105 = vld [vmem:[#allocation7 + $0xf0] sm:$0xff]
        %v1106 = vld [vmem:[#allocation7 + $0xf8] sm:$0xff]
        %v1107 = vlaneseq
        %v1108 = vshrl.u32 %v1107, 7
        %v1109 = vsub.s32 1, %v1108
        %v1110 = vrot.slane %v318, %v1109
        %v1111 = vlaneseq
        %v1112 = vshrl.u32 %v1111, 7
        %v1113 = vsub.s32 5, %v1112
        %v1114 = vrot.slane %v318, %v1113
        %v1117 = vlaneseq
        %v1118 = vshrl.u32 %v1117, 7
        %v1119 = vsub.s32 1, %v1118
        %v1120 = vrot.slane %v1110, %v1119
        %v1121 = vlaneseq
        %v1122 = vshrl.u32 %v1121, 7
        %v1123 = vsub.s32 1, %v1122
        %v1124 = vrot.slane %v1114, %v1123
        %v1157 = vunpack.c.l.b16 %v1075
        %v1158 = vunpack.c.h.b16 %v1075
        %v1159 = vunpack.c.l.b16 %v1076
        %v1160 = vunpack.c.h.b16 %v1076
        %v1161 = vunpack.c.l.b16 %v1077
        %v1162 = vunpack.c.h.b16 %v1077
        %v1163 = vunpack.c.l.b16 %v1078
        %v1164 = vunpack.c.h.b16 %v1078
        %v1165 = vunpack.c.l.b16 %v1079
        %v1166 = vunpack.c.h.b16 %v1079
        %v1167 = vunpack.c.l.b16 %v1080
        %v1168 = vunpack.c.h.b16 %v1080
        %v1169 = vunpack.c.l.b16 %v1081
        %v1170 = vunpack.c.h.b16 %v1081
        %v1171 = vunpack.c.l.b16 %v1082
        %v1172 = vunpack.c.h.b16 %v1082
        %v1173 = vunpack.c.l.b16 %v1083
        %v1174 = vunpack.c.h.b16 %v1083
        %v1175 = vunpack.c.l.b16 %v1084
        %v1176 = vunpack.c.h.b16 %v1084
        %v1177 = vunpack.c.l.b16 %v1085
        %v1178 = vunpack.c.h.b16 %v1085
        %v1179 = vunpack.c.l.b16 %v1086
        %v1180 = vunpack.c.h.b16 %v1086
        %v1181 = vunpack.c.l.b16 %v1087
        %v1182 = vunpack.c.h.b16 %v1087
        %v1183 = vunpack.c.l.b16 %v1088
        %v1184 = vunpack.c.h.b16 %v1088
        %v1185 = vunpack.c.l.b16 %v1089
        %v1186 = vunpack.c.h.b16 %v1089
        %v1187 = vunpack.c.l.b16 %v1090
        %v1188 = vunpack.c.h.b16 %v1090
        %v1189 = vunpack.c.l.b16 %v1091
        %v1190 = vunpack.c.h.b16 %v1091
        %v1191 = vunpack.c.l.b16 %v1092
        %v1192 = vunpack.c.h.b16 %v1092
        %v1193 = vunpack.c.l.b16 %v1093
        %v1194 = vunpack.c.h.b16 %v1093
        %v1195 = vunpack.c.l.b16 %v1094
        %v1196 = vunpack.c.h.b16 %v1094
        %v1197 = vunpack.c.l.b16 %v1095
        %v1198 = vunpack.c.h.b16 %v1095
        %v1199 = vunpack.c.l.b16 %v1096
        %v1200 = vunpack.c.h.b16 %v1096
        %v1201 = vunpack.c.l.b16 %v1097
        %v1202 = vunpack.c.h.b16 %v1097
        %v1203 = vunpack.c.l.b16 %v1098
        %v1204 = vunpack.c.h.b16 %v1098
        %v1205 = vunpack.c.l.b16 %v1099
        %v1206 = vunpack.c.h.b16 %v1099
        %v1207 = vunpack.c.l.b16 %v1100
        %v1208 = vunpack.c.h.b16 %v1100
        %v1209 = vunpack.c.l.b16 %v1101
        %v1210 = vunpack.c.h.b16 %v1101
        %v1211 = vunpack.c.l.b16 %v1102
        %v1212 = vunpack.c.h.b16 %v1102
        %v1213 = vunpack.c.l.b16 %v1103
        %v1214 = vunpack.c.h.b16 %v1103
        %v1215 = vunpack.c.l.b16 %v1104
        %v1216 = vunpack.c.h.b16 %v1104
        %v1217 = vunpack.c.l.b16 %v1105
        %v1218 = vunpack.c.h.b16 %v1105
        %v1219 = vunpack.c.l.b16 %v1106
        %v1220 = vunpack.c.h.b16 %v1106
        %v1221 = vpack.c.b16 %v1159, %v1157
        %v1222 = vpack.c.b16 %v1160, %v1158
        %v1223 = vpack.c.b16 %v1163, %v1161
        %v1224 = vpack.c.b16 %v1164, %v1162
        %v1225 = vpack.c.b16 %v1167, %v1165
        %v1226 = vpack.c.b16 %v1168, %v1166
        %v1227 = vpack.c.b16 %v1171, %v1169
        %v1228 = vpack.c.b16 %v1172, %v1170
        %v1229 = vpack.c.b16 %v1175, %v1173
        %v1230 = vpack.c.b16 %v1176, %v1174
        %v1231 = vpack.c.b16 %v1179, %v1177
        %v1232 = vpack.c.b16 %v1180, %v1178
        %v1233 = vpack.c.b16 %v1183, %v1181
        %v1234 = vpack.c.b16 %v1184, %v1182
        %v1235 = vpack.c.b16 %v1187, %v1185
        %v1236 = vpack.c.b16 %v1188, %v1186
        %v1237 = vpack.c.b16 %v1191, %v1189
        %v1238 = vpack.c.b16 %v1192, %v1190
        %v1239 = vpack.c.b16 %v1195, %v1193
        %v1240 = vpack.c.b16 %v1196, %v1194
        %v1241 = vpack.c.b16 %v1199, %v1197
        %v1242 = vpack.c.b16 %v1200, %v1198
        %v1243 = vpack.c.b16 %v1203, %v1201
        %v1244 = vpack.c.b16 %v1204, %v1202
        %v1245 = vpack.c.b16 %v1207, %v1205
        %v1246 = vpack.c.b16 %v1208, %v1206
        %v1247 = vpack.c.b16 %v1211, %v1209
        %v1248 = vpack.c.b16 %v1212, %v1210
        %v1249 = vpack.c.b16 %v1215, %v1213
        %v1250 = vpack.c.b16 %v1216, %v1214
        %v1251 = vpack.c.b16 %v1219, %v1217
        %v1252 = vpack.c.b16 %v1220, %v1218
        %1285 = vmatprep.subr.bf16.mxu0 %v1236
        %1286 = vmatpush1.bf16.msra.mxu0 %v1235
        %1287 = vmatprep.subr.bf16.mxu0 %v1234
        %1288 = vmatpush1.bf16.msra.mxu0 %v1233
        %1289 = vmatprep.subr.bf16.mxu0 %v1232
        %1290 = vmatpush1.bf16.msra.mxu0 %v1231
        %1291 = vmatprep.subr.bf16.mxu0 %v1230
        %1292 = vmatpush1.bf16.msra.mxu0 %v1229
        %1293 = vmatprep.subr.bf16.mxu0 %v1228
        %1294 = vmatpush1.bf16.msra.mxu0 %v1227
        %1295 = vmatprep.subr.bf16.mxu0 %v1226
        %1296 = vmatpush1.bf16.msra.mxu0 %v1225
        %1297 = vmatprep.subr.bf16.mxu0 %v1224
        %1298 = vmatpush1.bf16.msra.mxu0 %v1223
        %1299 = vmatprep.subr.bf16.mxu0 %v1222
        %1300 = vmatpush1.bf16.msra.mxu0 %v1221
        %1301 = vmatprep.subr.bf16.mxu0 %v1252
        %1302 = vmatpush2.bf16.msra.mxu0 %v1251
        %1303 = vmatprep.subr.bf16.mxu0 %v1250
        %1304 = vmatpush2.bf16.msra.mxu0 %v1249
        %1305 = vmatprep.subr.bf16.mxu0 %v1248
        %1306 = vmatpush2.bf16.msra.mxu0 %v1247
        %1307 = vmatprep.subr.bf16.mxu0 %v1246
        %1308 = vmatpush2.bf16.msra.mxu0 %v1245
        %1309 = vmatprep.subr.bf16.mxu0 %v1244
        %1310 = vmatpush2.bf16.msra.mxu0 %v1243
        %1311 = vmatprep.subr.bf16.mxu0 %v1242
        %1312 = vmatpush2.bf16.msra.mxu0 %v1241
        %1313 = vmatprep.subr.bf16.mxu0 %v1240
        %1314 = vmatpush2.bf16.msra.mxu0 %v1239
        %1315 = vmatprep.subr.bf16.mxu0 %v1238
        %1316 = vmatpush2.bf16.msra.mxu0 %v1237
        %1317 = vmatprep.mubr.bf16.mxu0 %v1038
        %1318 = vmatmul.mubr.bf16.gmra.mxu0 %v1037
        %v1319 = vpop.f32.mrf.mxu0
        %v1320 = vadd.f32 %v1120, %v1319
        %v1321 = vpop.f32.mrf.mxu0
        %v1322 = vadd.f32 %v1124, %v1321
        %v1323 = vpop.f32.mrf.mxu0
        %v1324 = vadd.f32 %v1120, %v1323
        %v1325 = vpop.f32.mrf.mxu0
        %v1326 = vadd.f32 %v1124, %v1325
        %1327 = vmatprep.mubr.bf16.mxu0 %v1040
        %1328 = vmatmul.mubr.bf16.gmra.mxu0 %v1039
        %v1329 = vpop.f32.mrf.mxu0
        %v1330 = vadd.f32 %v1120, %v1329
        %v1331 = vpop.f32.mrf.mxu0
        %v1332 = vadd.f32 %v1124, %v1331
        %v1333 = vpop.f32.mrf.mxu0
        %v1334 = vadd.f32 %v1120, %v1333
        %v1335 = vpop.f32.mrf.mxu0
        %v1336 = vadd.f32 %v1124, %v1335
        %1337 = vmatprep.mubr.bf16.mxu0 %v1042
        %1338 = vmatmul.mubr.bf16.gmra.mxu0 %v1041
        %v1339 = vpop.f32.mrf.mxu0
        %v1340 = vadd.f32 %v1120, %v1339
        %v1341 = vpop.f32.mrf.mxu0
        %v1342 = vadd.f32 %v1124, %v1341
        %v1343 = vpop.f32.mrf.mxu0
        %v1344 = vadd.f32 %v1120, %v1343
        %v1345 = vpop.f32.mrf.mxu0
        %v1346 = vadd.f32 %v1124, %v1345
        %1347 = vmatprep.mubr.bf16.mxu0 %v1044
        %1348 = vmatmul.mubr.bf16.gmra.mxu0 %v1043
        %v1349 = vpop.f32.mrf.mxu0
        %v1350 = vadd.f32 %v1120, %v1349
        %v1351 = vpop.f32.mrf.mxu0
        %v1352 = vadd.f32 %v1124, %v1351
        %v1353 = vpop.f32.mrf.mxu0
        %v1354 = vadd.f32 %v1120, %v1353
        %v1355 = vpop.f32.mrf.mxu0
        %v1356 = vadd.f32 %v1124, %v1355
        %1357 = vmatprep.mubr.bf16.mxu0 %v1046
        %1358 = vmatmul.mubr.bf16.gmra.mxu0 %v1045
        %v1359 = vpop.f32.mrf.mxu0
        %v1360 = vadd.f32 %v1120, %v1359
        %v1361 = vpop.f32.mrf.mxu0
        %v1362 = vadd.f32 %v1124, %v1361
        %v1363 = vpop.f32.mrf.mxu0
        %v1364 = vadd.f32 %v1120, %v1363
        %v1365 = vpop.f32.mrf.mxu0
        %v1366 = vadd.f32 %v1124, %v1365
        %1367 = vmatprep.mubr.bf16.mxu0 %v1048
        %1368 = vmatmul.mubr.bf16.gmra.mxu0 %v1047
        %v1369 = vpop.f32.mrf.mxu0
        %v1370 = vadd.f32 %v1120, %v1369
        %v1371 = vpop.f32.mrf.mxu0
        %v1372 = vadd.f32 %v1124, %v1371
        %v1373 = vpop.f32.mrf.mxu0
        %v1374 = vadd.f32 %v1120, %v1373
        %v1375 = vpop.f32.mrf.mxu0
        %v1376 = vadd.f32 %v1124, %v1375
        %1377 = vmatprep.mubr.bf16.mxu0 %v1050
        %1378 = vmatmul.mubr.bf16.gmra.mxu0 %v1049
        %v1379 = vpop.f32.mrf.mxu0
        %v1380 = vadd.f32 %v1120, %v1379
        %v1381 = vpop.f32.mrf.mxu0
        %v1382 = vadd.f32 %v1124, %v1381
        %v1383 = vpop.f32.mrf.mxu0
        %v1384 = vadd.f32 %v1120, %v1383
        %v1385 = vpop.f32.mrf.mxu0
        %v1386 = vadd.f32 %v1124, %v1385
        %1387 = vmatprep.mubr.bf16.mxu0 %v1052
        %1388 = vmatmul.mubr.bf16.gmra.mxu0 %v1051
        %v1389 = vpop.f32.mrf.mxu0
        %v1390 = vadd.f32 %v1120, %v1389
        %v1391 = vpop.f32.mrf.mxu0
        %v1392 = vadd.f32 %v1124, %v1391
        %v1393 = vpop.f32.mrf.mxu0
        %v1394 = vadd.f32 %v1120, %v1393
        %v1395 = vpop.f32.mrf.mxu0
        %v1396 = vadd.f32 %v1124, %v1395
        %1397 = vmatprep.mubr.bf16.mxu0 %v1054
        %1398 = vmatmul.mubr.bf16.gmra.mxu0 %v1053
        %v1399 = vpop.f32.mrf.mxu0
        %v1400 = vadd.f32 %v1120, %v1399
        %v1401 = vpop.f32.mrf.mxu0
        %v1402 = vadd.f32 %v1124, %v1401
        %v1403 = vpop.f32.mrf.mxu0
        %v1404 = vadd.f32 %v1120, %v1403
        %v1405 = vpop.f32.mrf.mxu0
        %v1406 = vadd.f32 %v1124, %v1405
        %1407 = vmatprep.mubr.bf16.mxu0 %v1056
        %1408 = vmatmul.mubr.bf16.gmra.mxu0 %v1055
        %v1409 = vpop.f32.mrf.mxu0
        %v1410 = vadd.f32 %v1120, %v1409
        %v1411 = vpop.f32.mrf.mxu0
        %v1412 = vadd.f32 %v1124, %v1411
        %v1413 = vpop.f32.mrf.mxu0
        %v1414 = vadd.f32 %v1120, %v1413
        %v1415 = vpop.f32.mrf.mxu0
        %v1416 = vadd.f32 %v1124, %v1415
        %1417 = vmatprep.mubr.bf16.mxu0 %v1058
        %1418 = vmatmul.mubr.bf16.gmra.mxu0 %v1057
        %v1419 = vpop.f32.mrf.mxu0
        %v1420 = vadd.f32 %v1120, %v1419
        %v1421 = vpop.f32.mrf.mxu0
        %v1422 = vadd.f32 %v1124, %v1421
        %v1423 = vpop.f32.mrf.mxu0
        %v1424 = vadd.f32 %v1120, %v1423
        %v1425 = vpop.f32.mrf.mxu0
        %v1426 = vadd.f32 %v1124, %v1425
        %1427 = vmatprep.mubr.bf16.mxu0 %v1060
        %1428 = vmatmul.mubr.bf16.gmra.mxu0 %v1059
        %v1429 = vpop.f32.mrf.mxu0
        %v1430 = vadd.f32 %v1120, %v1429
        %v1431 = vpop.f32.mrf.mxu0
        %v1432 = vadd.f32 %v1124, %v1431
        %v1433 = vpop.f32.mrf.mxu0
        %v1434 = vadd.f32 %v1120, %v1433
        %v1435 = vpop.f32.mrf.mxu0
        %v1436 = vadd.f32 %v1124, %v1435
        %1437 = vmatprep.mubr.bf16.mxu0 %v1062
        %1438 = vmatmul.mubr.bf16.gmra.mxu0 %v1061
        %v1439 = vpop.f32.mrf.mxu0
        %v1440 = vadd.f32 %v1120, %v1439
        %v1441 = vpop.f32.mrf.mxu0
        %v1442 = vadd.f32 %v1124, %v1441
        %v1443 = vpop.f32.mrf.mxu0
        %v1444 = vadd.f32 %v1120, %v1443
        %v1445 = vpop.f32.mrf.mxu0
        %v1446 = vadd.f32 %v1124, %v1445
        %1447 = vmatprep.mubr.bf16.mxu0 %v1064
        %1448 = vmatmul.mubr.bf16.gmra.mxu0 %v1063
        %v1449 = vpop.f32.mrf.mxu0
        %v1450 = vadd.f32 %v1120, %v1449
        %v1451 = vpop.f32.mrf.mxu0
        %v1452 = vadd.f32 %v1124, %v1451
        %v1453 = vpop.f32.mrf.mxu0
        %v1454 = vadd.f32 %v1120, %v1453
        %v1455 = vpop.f32.mrf.mxu0
        %v1456 = vadd.f32 %v1124, %v1455
        %1457 = vmatprep.mubr.bf16.mxu0 %v1066
        %1458 = vmatmul.mubr.bf16.gmra.mxu0 %v1065
        %v1459 = vpop.f32.mrf.mxu0
        %v1460 = vadd.f32 %v1120, %v1459
        %v1461 = vpop.f32.mrf.mxu0
        %v1462 = vadd.f32 %v1124, %v1461
        %v1463 = vpop.f32.mrf.mxu0
        %v1464 = vadd.f32 %v1120, %v1463
        %v1465 = vpop.f32.mrf.mxu0
        %v1466 = vadd.f32 %v1124, %v1465
        %1467 = vmatprep.mubr.bf16.mxu0 %v1068
        %1468 = vmatmul.mubr.bf16.gmra.mxu0 %v1067
        %v1469 = vpop.f32.mrf.mxu0
        %v1470 = vadd.f32 %v1120, %v1469
        %v1471 = vpop.f32.mrf.mxu0
        %v1472 = vadd.f32 %v1124, %v1471
        %v1473 = vpop.f32.mrf.mxu0
        %v1474 = vadd.f32 %v1120, %v1473
        %v1475 = vpop.f32.mrf.mxu0
        %v1476 = vadd.f32 %v1124, %v1475
        %1477 = vmatprep.mubr.bf16.mxu0 %v1070
        %1478 = vmatmul.mubr.bf16.gmra.mxu0 %v1069
        %v1479 = vpop.f32.mrf.mxu0
        %v1480 = vadd.f32 %v1120, %v1479
        %v1481 = vpop.f32.mrf.mxu0
        %v1482 = vadd.f32 %v1124, %v1481
        %v1483 = vpop.f32.mrf.mxu0
        %v1484 = vadd.f32 %v1120, %v1483
        %v1485 = vpop.f32.mrf.mxu0
        %v1486 = vadd.f32 %v1124, %v1485
        %1487 = vmatprep.mubr.bf16.mxu0 %v1072
        %1488 = vmatmul.mubr.bf16.gmra.mxu0 %v1071
        %v1489 = vpop.f32.mrf.mxu0
        %v1490 = vadd.f32 %v1120, %v1489
        %v1491 = vpop.f32.mrf.mxu0
        %v1492 = vadd.f32 %v1124, %v1491
        %v1493 = vpop.f32.mrf.mxu0
        %v1494 = vadd.f32 %v1120, %v1493
        %v1495 = vpop.f32.mrf.mxu0
        %v1496 = vadd.f32 %v1124, %v1495
        %1497 = vmatprep.mubr.bf16.mxu0 %v1074
        %1498 = vmatmul.mubr.bf16.gmra.mxu0 %v1073
        %v1499 = vpop.f32.mrf.mxu0
        %v1500 = vadd.f32 %v1120, %v1499
        %v1501 = vpop.f32.mrf.mxu0
        %v1502 = vadd.f32 %v1124, %v1501
        %v1503 = vpop.f32.mrf.mxu0
        %v1504 = vadd.f32 %v1120, %v1503
        %v1505 = vpop.f32.mrf.mxu0
        %v1506 = vadd.f32 %v1124, %v1505
        %1507 = vdwg.mxu0
        %v1508 = vadd.f32 %v1320, %v1322
        %1509 = vadd.xlane.f32.xlu0 %v1508
        %v1510 = vpop.xlane.xlu0 %1509
        %v1511 = vadd.f32 %v1324, %v1326
        %1512 = vadd.xlane.f32.xlu0 %v1511
        %v1513 = vpop.xlane.xlu0 %1512
        %v1514 = vadd.f32 %v1330, %v1332
        %1515 = vadd.xlane.f32.xlu0 %v1514
        %v1516 = vpop.xlane.xlu0 %1515
        %v1517 = vadd.f32 %v1334, %v1336
        %1518 = vadd.xlane.f32.xlu0 %v1517
        %v1519 = vpop.xlane.xlu0 %1518
        %v1520 = vadd.f32 %v1340, %v1342
        %1521 = vadd.xlane.f32.xlu0 %v1520
        %v1522 = vpop.xlane.xlu0 %1521
        %v1523 = vadd.f32 %v1344, %v1346
        %1524 = vadd.xlane.f32.xlu0 %v1523
        %v1525 = vpop.xlane.xlu0 %1524
        %v1526 = vadd.f32 %v1350, %v1352
        %1527 = vadd.xlane.f32.xlu0 %v1526
        %v1528 = vpop.xlane.xlu0 %1527
        %v1529 = vadd.f32 %v1354, %v1356
        %1530 = vadd.xlane.f32.xlu0 %v1529
        %v1531 = vpop.xlane.xlu0 %1530
        %v1532 = vadd.f32 %v1360, %v1362
        %1533 = vadd.xlane.f32.xlu0 %v1532
        %v1534 = vpop.xlane.xlu0 %1533
        %v1535 = vadd.f32 %v1364, %v1366
        %1536 = vadd.xlane.f32.xlu0 %v1535
        %v1537 = vpop.xlane.xlu0 %1536
        %v1538 = vadd.f32 %v1370, %v1372
        %1539 = vadd.xlane.f32.xlu0 %v1538
        %v1540 = vpop.xlane.xlu0 %1539
        %v1541 = vadd.f32 %v1374, %v1376
        %1542 = vadd.xlane.f32.xlu0 %v1541
        %v1543 = vpop.xlane.xlu0 %1542
        %v1544 = vadd.f32 %v1380, %v1382
        %1545 = vadd.xlane.f32.xlu0 %v1544
        %v1546 = vpop.xlane.xlu0 %1545
        %v1547 = vadd.f32 %v1384, %v1386
        %1548 = vadd.xlane.f32.xlu0 %v1547
        %v1549 = vpop.xlane.xlu0 %1548
        %v1550 = vadd.f32 %v1390, %v1392
        %1551 = vadd.xlane.f32.xlu0 %v1550
        %v1552 = vpop.xlane.xlu0 %1551
        %v1553 = vadd.f32 %v1394, %v1396
        %1554 = vadd.xlane.f32.xlu0 %v1553
        %v1555 = vpop.xlane.xlu0 %1554
        %v1556 = vadd.f32 %v1400, %v1402
        %1557 = vadd.xlane.f32.xlu0 %v1556
        %v1558 = vpop.xlane.xlu0 %1557
        %v1559 = vadd.f32 %v1404, %v1406
        %1560 = vadd.xlane.f32.xlu0 %v1559
        %v1561 = vpop.xlane.xlu0 %1560
        %v1562 = vadd.f32 %v1410, %v1412
        %1563 = vadd.xlane.f32.xlu0 %v1562
        %v1564 = vpop.xlane.xlu0 %1563
        %v1565 = vadd.f32 %v1414, %v1416
        %1566 = vadd.xlane.f32.xlu0 %v1565
        %v1567 = vpop.xlane.xlu0 %1566
        %v1568 = vadd.f32 %v1420, %v1422
        %1569 = vadd.xlane.f32.xlu0 %v1568
        %v1570 = vpop.xlane.xlu0 %1569
        %v1571 = vadd.f32 %v1424, %v1426
        %1572 = vadd.xlane.f32.xlu0 %v1571
        %v1573 = vpop.xlane.xlu0 %1572
        %v1574 = vadd.f32 %v1430, %v1432
        %1575 = vadd.xlane.f32.xlu0 %v1574
        %v1576 = vpop.xlane.xlu0 %1575
        %v1577 = vadd.f32 %v1434, %v1436
        %1578 = vadd.xlane.f32.xlu0 %v1577
        %v1579 = vpop.xlane.xlu0 %1578
        %v1580 = vadd.f32 %v1440, %v1442
        %1581 = vadd.xlane.f32.xlu0 %v1580
        %v1582 = vpop.xlane.xlu0 %1581
        %v1583 = vadd.f32 %v1444, %v1446
        %1584 = vadd.xlane.f32.xlu0 %v1583
        %v1585 = vpop.xlane.xlu0 %1584
        %v1586 = vadd.f32 %v1450, %v1452
        %1587 = vadd.xlane.f32.xlu0 %v1586
        %v1588 = vpop.xlane.xlu0 %1587
        %v1589 = vadd.f32 %v1454, %v1456
        %1590 = vadd.xlane.f32.xlu0 %v1589
        %v1591 = vpop.xlane.xlu0 %1590
        %v1592 = vadd.f32 %v1460, %v1462
        %1593 = vadd.xlane.f32.xlu0 %v1592
        %v1594 = vpop.xlane.xlu0 %1593
        %v1595 = vadd.f32 %v1464, %v1466
        %1596 = vadd.xlane.f32.xlu0 %v1595
        %v1597 = vpop.xlane.xlu0 %1596
        %v1598 = vadd.f32 %v1470, %v1472
        %1599 = vadd.xlane.f32.xlu0 %v1598
        %v1600 = vpop.xlane.xlu0 %1599
        %v1601 = vadd.f32 %v1474, %v1476
        %1602 = vadd.xlane.f32.xlu0 %v1601
        %v1603 = vpop.xlane.xlu0 %1602
        %v1604 = vadd.f32 %v1480, %v1482
        %1605 = vadd.xlane.f32.xlu0 %v1604
        %v1606 = vpop.xlane.xlu0 %1605
        %v1607 = vadd.f32 %v1484, %v1486
        %1608 = vadd.xlane.f32.xlu0 %v1607
        %v1609 = vpop.xlane.xlu0 %1608
        %v1610 = vadd.f32 %v1490, %v1492
        %1611 = vadd.xlane.f32.xlu0 %v1610
        %v1612 = vpop.xlane.xlu0 %1611
        %v1613 = vadd.f32 %v1494, %v1496
        %1614 = vadd.xlane.f32.xlu0 %v1613
        %v1615 = vpop.xlane.xlu0 %1614
        %v1616 = vadd.f32 %v1500, %v1502
        %1617 = vadd.xlane.f32.xlu0 %v1616
        %v1618 = vpop.xlane.xlu0 %1617
        %v1619 = vadd.f32 %v1504, %v1506
        %1620 = vadd.xlane.f32.xlu0 %v1619
        %v1621 = vpop.xlane.xlu0 %1620
        %v1622 = vmul.f32 %v1320, %v1320
        %v1623 = vmul.f32 %v1322, %v1322
        %v1624 = vmul.f32 %v1324, %v1324
        %v1625 = vmul.f32 %v1326, %v1326
        %v1626 = vmul.f32 %v1330, %v1330
        %v1627 = vmul.f32 %v1332, %v1332
        %v1628 = vmul.f32 %v1334, %v1334
        %v1629 = vmul.f32 %v1336, %v1336
        %v1630 = vmul.f32 %v1340, %v1340
        %v1631 = vmul.f32 %v1342, %v1342
        %v1632 = vmul.f32 %v1344, %v1344
        %v1633 = vmul.f32 %v1346, %v1346
        %v1634 = vmul.f32 %v1350, %v1350
        %v1635 = vmul.f32 %v1352, %v1352
        %v1636 = vmul.f32 %v1354, %v1354
        %v1637 = vmul.f32 %v1356, %v1356
        %v1638 = vmul.f32 %v1360, %v1360
        %v1639 = vmul.f32 %v1362, %v1362
        %v1640 = vmul.f32 %v1364, %v1364
        %v1641 = vmul.f32 %v1366, %v1366
        %v1642 = vmul.f32 %v1370, %v1370
        %v1643 = vmul.f32 %v1372, %v1372
        %v1644 = vmul.f32 %v1374, %v1374
        %v1645 = vmul.f32 %v1376, %v1376
        %v1646 = vmul.f32 %v1380, %v1380
        %v1647 = vmul.f32 %v1382, %v1382
        %v1648 = vmul.f32 %v1384, %v1384
        %v1649 = vmul.f32 %v1386, %v1386
        %v1650 = vmul.f32 %v1390, %v1390
        %v1651 = vmul.f32 %v1392, %v1392
        %v1652 = vmul.f32 %v1394, %v1394
        %v1653 = vmul.f32 %v1396, %v1396
        %v1654 = vmul.f32 %v1400, %v1400
        %v1655 = vmul.f32 %v1402, %v1402
        %v1656 = vmul.f32 %v1404, %v1404
        %v1657 = vmul.f32 %v1406, %v1406
        %v1658 = vmul.f32 %v1410, %v1410
        %v1659 = vmul.f32 %v1412, %v1412
        %v1660 = vmul.f32 %v1414, %v1414
        %v1661 = vmul.f32 %v1416, %v1416
        %v1662 = vmul.f32 %v1420, %v1420
        %v1663 = vmul.f32 %v1422, %v1422
        %v1664 = vmul.f32 %v1424, %v1424
        %v1665 = vmul.f32 %v1426, %v1426
        %v1666 = vmul.f32 %v1430, %v1430
        %v1667 = vmul.f32 %v1432, %v1432
        %v1668 = vmul.f32 %v1434, %v1434
        %v1669 = vmul.f32 %v1436, %v1436
        %v1670 = vmul.f32 %v1440, %v1440
        %v1671 = vmul.f32 %v1442, %v1442
        %v1672 = vmul.f32 %v1444, %v1444
        %v1673 = vmul.f32 %v1446, %v1446
        %v1674 = vmul.f32 %v1450, %v1450
        %v1675 = vmul.f32 %v1452, %v1452
        %v1676 = vmul.f32 %v1454, %v1454
        %v1677 = vmul.f32 %v1456, %v1456
        %v1678 = vmul.f32 %v1460, %v1460
        %v1679 = vmul.f32 %v1462, %v1462
        %v1680 = vmul.f32 %v1464, %v1464
        %v1681 = vmul.f32 %v1466, %v1466
        %v1682 = vmul.f32 %v1470, %v1470
        %v1683 = vmul.f32 %v1472, %v1472
        %v1684 = vmul.f32 %v1474, %v1474
        %v1685 = vmul.f32 %v1476, %v1476
        %v1686 = vmul.f32 %v1480, %v1480
        %v1687 = vmul.f32 %v1482, %v1482
        %v1688 = vmul.f32 %v1484, %v1484
        %v1689 = vmul.f32 %v1486, %v1486
        %v1690 = vmul.f32 %v1490, %v1490
        %v1691 = vmul.f32 %v1492, %v1492
        %v1692 = vmul.f32 %v1494, %v1494
        %v1693 = vmul.f32 %v1496, %v1496
        %v1694 = vmul.f32 %v1500, %v1500
        %v1695 = vmul.f32 %v1502, %v1502
        %v1696 = vmul.f32 %v1504, %v1504
        %v1697 = vmul.f32 %v1506, %v1506
        %v1698 = vadd.f32 %v1622, %v1623
        %1699 = vadd.xlane.f32.xlu0 %v1698
        %v1700 = vpop.xlane.xlu0 %1699
        %v1701 = vadd.f32 %v1624, %v1625
        %1702 = vadd.xlane.f32.xlu0 %v1701
        %v1703 = vpop.xlane.xlu0 %1702
        %v1704 = vadd.f32 %v1626, %v1627
        %1705 = vadd.xlane.f32.xlu0 %v1704
        %v1706 = vpop.xlane.xlu0 %1705
        %v1707 = vadd.f32 %v1628, %v1629
        %1708 = vadd.xlane.f32.xlu0 %v1707
        %v1709 = vpop.xlane.xlu0 %1708
        %v1710 = vadd.f32 %v1630, %v1631
        %1711 = vadd.xlane.f32.xlu0 %v1710
        %v1712 = vpop.xlane.xlu0 %1711
        %v1713 = vadd.f32 %v1632, %v1633
        %1714 = vadd.xlane.f32.xlu0 %v1713
        %v1715 = vpop.xlane.xlu0 %1714
        %v1716 = vadd.f32 %v1634, %v1635
        %1717 = vadd.xlane.f32.xlu0 %v1716
        %v1718 = vpop.xlane.xlu0 %1717
        %v1719 = vadd.f32 %v1636, %v1637
        %1720 = vadd.xlane.f32.xlu0 %v1719
        %v1721 = vpop.xlane.xlu0 %1720
        %v1722 = vadd.f32 %v1638, %v1639
        %1723 = vadd.xlane.f32.xlu0 %v1722
        %v1724 = vpop.xlane.xlu0 %1723
        %v1725 = vadd.f32 %v1640, %v1641
        %1726 = vadd.xlane.f32.xlu0 %v1725
        %v1727 = vpop.xlane.xlu0 %1726
        %v1728 = vadd.f32 %v1642, %v1643
        %1729 = vadd.xlane.f32.xlu0 %v1728
        %v1730 = vpop.xlane.xlu0 %1729
        %v1731 = vadd.f32 %v1644, %v1645
        %1732 = vadd.xlane.f32.xlu0 %v1731
        %v1733 = vpop.xlane.xlu0 %1732
        %v1734 = vadd.f32 %v1646, %v1647
        %1735 = vadd.xlane.f32.xlu0 %v1734
        %v1736 = vpop.xlane.xlu0 %1735
        %v1737 = vadd.f32 %v1648, %v1649
        %1738 = vadd.xlane.f32.xlu0 %v1737
        %v1739 = vpop.xlane.xlu0 %1738
        %v1740 = vadd.f32 %v1650, %v1651
        %1741 = vadd.xlane.f32.xlu0 %v1740
        %v1742 = vpop.xlane.xlu0 %1741
        %v1743 = vadd.f32 %v1652, %v1653
        %1744 = vadd.xlane.f32.xlu0 %v1743
        %v1745 = vpop.xlane.xlu0 %1744
        %v1746 = vadd.f32 %v1654, %v1655
        %1747 = vadd.xlane.f32.xlu0 %v1746
        %v1748 = vpop.xlane.xlu0 %1747
        %v1749 = vadd.f32 %v1656, %v1657
        %1750 = vadd.xlane.f32.xlu0 %v1749
        %v1751 = vpop.xlane.xlu0 %1750
        %v1752 = vadd.f32 %v1658, %v1659
        %1753 = vadd.xlane.f32.xlu0 %v1752
        %v1754 = vpop.xlane.xlu0 %1753
        %v1755 = vadd.f32 %v1660, %v1661
        %1756 = vadd.xlane.f32.xlu0 %v1755
        %v1757 = vpop.xlane.xlu0 %1756
        %v1758 = vadd.f32 %v1662, %v1663
        %1759 = vadd.xlane.f32.xlu0 %v1758
        %v1760 = vpop.xlane.xlu0 %1759
        %v1761 = vadd.f32 %v1664, %v1665
        %1762 = vadd.xlane.f32.xlu0 %v1761
        %v1763 = vpop.xlane.xlu0 %1762
        %v1764 = vadd.f32 %v1666, %v1667
        %1765 = vadd.xlane.f32.xlu0 %v1764
        %v1766 = vpop.xlane.xlu0 %1765
        %v1767 = vadd.f32 %v1668, %v1669
        %1768 = vadd.xlane.f32.xlu0 %v1767
        %v1769 = vpop.xlane.xlu0 %1768
        %v1770 = vadd.f32 %v1670, %v1671
        %1771 = vadd.xlane.f32.xlu0 %v1770
        %v1772 = vpop.xlane.xlu0 %1771
        %v1773 = vadd.f32 %v1672, %v1673
        %1774 = vadd.xlane.f32.xlu0 %v1773
        %v1775 = vpop.xlane.xlu0 %1774
        %v1776 = vadd.f32 %v1674, %v1675
        %1777 = vadd.xlane.f32.xlu0 %v1776
        %v1778 = vpop.xlane.xlu0 %1777
        %v1779 = vadd.f32 %v1676, %v1677
        %1780 = vadd.xlane.f32.xlu0 %v1779
        %v1781 = vpop.xlane.xlu0 %1780
        %v1782 = vadd.f32 %v1678, %v1679
        %1783 = vadd.xlane.f32.xlu0 %v1782
        %v1784 = vpop.xlane.xlu0 %1783
        %v1785 = vadd.f32 %v1680, %v1681
        %1786 = vadd.xlane.f32.xlu0 %v1785
        %v1787 = vpop.xlane.xlu0 %1786
        %v1788 = vadd.f32 %v1682, %v1683
        %1789 = vadd.xlane.f32.xlu0 %v1788
        %v1790 = vpop.xlane.xlu0 %1789
        %v1791 = vadd.f32 %v1684, %v1685
        %1792 = vadd.xlane.f32.xlu0 %v1791
        %v1793 = vpop.xlane.xlu0 %1792
        %v1794 = vadd.f32 %v1686, %v1687
        %1795 = vadd.xlane.f32.xlu0 %v1794
        %v1796 = vpop.xlane.xlu0 %1795
        %v1797 = vadd.f32 %v1688, %v1689
        %1798 = vadd.xlane.f32.xlu0 %v1797
        %v1799 = vpop.xlane.xlu0 %1798
        %v1800 = vadd.f32 %v1690, %v1691
        %1801 = vadd.xlane.f32.xlu0 %v1800
        %v1802 = vpop.xlane.xlu0 %1801
        %v1803 = vadd.f32 %v1692, %v1693
        %1804 = vadd.xlane.f32.xlu0 %v1803
        %v1805 = vpop.xlane.xlu0 %1804
        %v1806 = vadd.f32 %v1694, %v1695
        %1807 = vadd.xlane.f32.xlu0 %v1806
        %v1808 = vpop.xlane.xlu0 %1807
        %v1809 = vadd.f32 %v1696, %v1697
        %1810 = vadd.xlane.f32.xlu0 %v1809
        %v1811 = vpop.xlane.xlu0 %1810
        %v1812 = vmul.f32 %v1510, 0.00390625
        %v1813 = vmul.f32 %v1513, 0.00390625
        %v1814 = vmul.f32 %v1516, 0.00390625
        %v1815 = vmul.f32 %v1519, 0.00390625
        %v1816 = vmul.f32 %v1522, 0.00390625
        %v1817 = vmul.f32 %v1525, 0.00390625
        %v1818 = vmul.f32 %v1528, 0.00390625
        %v1819 = vmul.f32 %v1531, 0.00390625
        %v1820 = vmul.f32 %v1534, 0.00390625
        %v1821 = vmul.f32 %v1537, 0.00390625
        %v1822 = vmul.f32 %v1540, 0.00390625
        %v1823 = vmul.f32 %v1543, 0.00390625
        %v1824 = vmul.f32 %v1546, 0.00390625
        %v1825 = vmul.f32 %v1549, 0.00390625
        %v1826 = vmul.f32 %v1552, 0.00390625
        %v1827 = vmul.f32 %v1555, 0.00390625
        %v1828 = vmul.f32 %v1558, 0.00390625
        %v1829 = vmul.f32 %v1561, 0.00390625
        %v1830 = vmul.f32 %v1564, 0.00390625
        %v1831 = vmul.f32 %v1567, 0.00390625
        %v1832 = vmul.f32 %v1570, 0.00390625
        %v1833 = vmul.f32 %v1573, 0.00390625
        %v1834 = vmul.f32 %v1576, 0.00390625
        %v1835 = vmul.f32 %v1579, 0.00390625
        %v1836 = vmul.f32 %v1582, 0.00390625
        %v1837 = vmul.f32 %v1585, 0.00390625
        %v1838 = vmul.f32 %v1588, 0.00390625
        %v1839 = vmul.f32 %v1591, 0.00390625
        %v1840 = vmul.f32 %v1594, 0.00390625
        %v1841 = vmul.f32 %v1597, 0.00390625
        %v1842 = vmul.f32 %v1600, 0.00390625
        %v1843 = vmul.f32 %v1603, 0.00390625
        %v1844 = vmul.f32 %v1606, 0.00390625
        %v1845 = vmul.f32 %v1609, 0.00390625
        %v1846 = vmul.f32 %v1612, 0.00390625
        %v1847 = vmul.f32 %v1615, 0.00390625
        %v1848 = vmul.f32 %v1618, 0.00390625
        %v1849 = vmul.f32 %v1621, 0.00390625
        %v1850 = vmul.f32 %v1700, 0.00390625
        %v1851 = vmul.f32 %v1703, 0.00390625
        %v1852 = vmul.f32 %v1706, 0.00390625
        %v1853 = vmul.f32 %v1709, 0.00390625
        %v1854 = vmul.f32 %v1712, 0.00390625
        %v1855 = vmul.f32 %v1715, 0.00390625
        %v1856 = vmul.f32 %v1718, 0.00390625
        %v1857 = vmul.f32 %v1721, 0.00390625
        %v1858 = vmul.f32 %v1724, 0.00390625
        %v1859 = vmul.f32 %v1727, 0.00390625
        %v1860 = vmul.f32 %v1730, 0.00390625
        %v1861 = vmul.f32 %v1733, 0.00390625
        %v1862 = vmul.f32 %v1736, 0.00390625
        %v1863 = vmul.f32 %v1739, 0.00390625
        %v1864 = vmul.f32 %v1742, 0.00390625
        %v1865 = vmul.f32 %v1745, 0.00390625
        %v1866 = vmul.f32 %v1748, 0.00390625
        %v1867 = vmul.f32 %v1751, 0.00390625
        %v1868 = vmul.f32 %v1754, 0.00390625
        %v1869 = vmul.f32 %v1757, 0.00390625
        %v1870 = vmul.f32 %v1760, 0.00390625
        %v1871 = vmul.f32 %v1763, 0.00390625
        %v1872 = vmul.f32 %v1766, 0.00390625
        %v1873 = vmul.f32 %v1769, 0.00390625
        %v1874 = vmul.f32 %v1772, 0.00390625
        %v1875 = vmul.f32 %v1775, 0.00390625
        %v1876 = vmul.f32 %v1778, 0.00390625
        %v1877 = vmul.f32 %v1781, 0.00390625
        %v1878 = vmul.f32 %v1784, 0.00390625
        %v1879 = vmul.f32 %v1787, 0.00390625
        %v1880 = vmul.f32 %v1790, 0.00390625
        %v1881 = vmul.f32 %v1793, 0.00390625
        %v1882 = vmul.f32 %v1796, 0.00390625
        %v1883 = vmul.f32 %v1799, 0.00390625
        %v1884 = vmul.f32 %v1802, 0.00390625
        %v1885 = vmul.f32 %v1805, 0.00390625
        %v1886 = vmul.f32 %v1808, 0.00390625
        %v1887 = vmul.f32 %v1811, 0.00390625
        %v1888 = vmul.f32 %v1812, %v1812
        %v1889 = vmul.f32 %v1813, %v1813
        %v1890 = vmul.f32 %v1814, %v1814
        %v1891 = vmul.f32 %v1815, %v1815
        %v1892 = vmul.f32 %v1816, %v1816
        %v1893 = vmul.f32 %v1817, %v1817
        %v1894 = vmul.f32 %v1818, %v1818
        %v1895 = vmul.f32 %v1819, %v1819
        %v1896 = vmul.f32 %v1820, %v1820
        %v1897 = vmul.f32 %v1821, %v1821
        %v1898 = vmul.f32 %v1822, %v1822
        %v1899 = vmul.f32 %v1823, %v1823
        %v1900 = vmul.f32 %v1824, %v1824
        %v1901 = vmul.f32 %v1825, %v1825
        %v1902 = vmul.f32 %v1826, %v1826
        %v1903 = vmul.f32 %v1827, %v1827
        %v1904 = vmul.f32 %v1828, %v1828
        %v1905 = vmul.f32 %v1829, %v1829
        %v1906 = vmul.f32 %v1830, %v1830
        %v1907 = vmul.f32 %v1831, %v1831
        %v1908 = vmul.f32 %v1832, %v1832
        %v1909 = vmul.f32 %v1833, %v1833
        %v1910 = vmul.f32 %v1834, %v1834
        %v1911 = vmul.f32 %v1835, %v1835
        %v1912 = vmul.f32 %v1836, %v1836
        %v1913 = vmul.f32 %v1837, %v1837
        %v1914 = vmul.f32 %v1838, %v1838
        %v1915 = vmul.f32 %v1839, %v1839
        %v1916 = vmul.f32 %v1840, %v1840
        %v1917 = vmul.f32 %v1841, %v1841
        %v1918 = vmul.f32 %v1842, %v1842
        %v1919 = vmul.f32 %v1843, %v1843
        %v1920 = vmul.f32 %v1844, %v1844
        %v1921 = vmul.f32 %v1845, %v1845
        %v1922 = vmul.f32 %v1846, %v1846
        %v1923 = vmul.f32 %v1847, %v1847
        %v1924 = vmul.f32 %v1848, %v1848
        %v1925 = vmul.f32 %v1849, %v1849
        %v1926 = vsub.f32 %v1850, %v1888
        %v1927 = vsub.f32 %v1851, %v1889
        %v1928 = vsub.f32 %v1852, %v1890
        %v1929 = vsub.f32 %v1853, %v1891
        %v1930 = vsub.f32 %v1854, %v1892
        %v1931 = vsub.f32 %v1855, %v1893
        %v1932 = vsub.f32 %v1856, %v1894
        %v1933 = vsub.f32 %v1857, %v1895
        %v1934 = vsub.f32 %v1858, %v1896
        %v1935 = vsub.f32 %v1859, %v1897
        %v1936 = vsub.f32 %v1860, %v1898
        %v1937 = vsub.f32 %v1861, %v1899
        %v1938 = vsub.f32 %v1862, %v1900
        %v1939 = vsub.f32 %v1863, %v1901
        %v1940 = vsub.f32 %v1864, %v1902
        %v1941 = vsub.f32 %v1865, %v1903
        %v1942 = vsub.f32 %v1866, %v1904
        %v1943 = vsub.f32 %v1867, %v1905
        %v1944 = vsub.f32 %v1868, %v1906
        %v1945 = vsub.f32 %v1869, %v1907
        %v1946 = vsub.f32 %v1870, %v1908
        %v1947 = vsub.f32 %v1871, %v1909
        %v1948 = vsub.f32 %v1872, %v1910
        %v1949 = vsub.f32 %v1873, %v1911
        %v1950 = vsub.f32 %v1874, %v1912
        %v1951 = vsub.f32 %v1875, %v1913
        %v1952 = vsub.f32 %v1876, %v1914
        %v1953 = vsub.f32 %v1877, %v1915
        %v1954 = vsub.f32 %v1878, %v1916
        %v1955 = vsub.f32 %v1879, %v1917
        %v1956 = vsub.f32 %v1880, %v1918
        %v1957 = vsub.f32 %v1881, %v1919
        %v1958 = vsub.f32 %v1882, %v1920
        %v1959 = vsub.f32 %v1883, %v1921
        %v1960 = vsub.f32 %v1884, %v1922
        %v1961 = vsub.f32 %v1885, %v1923
        %v1962 = vsub.f32 %v1886, %v1924
        %v1963 = vsub.f32 %v1887, %v1925
        %v1964 = vmax.f32 %v1926, 0.0
        %v1965 = vmax.f32 %v1927, 0.0
        %v1966 = vmax.f32 %v1928, 0.0
        %v1967 = vmax.f32 %v1929, 0.0
        %v1968 = vmax.f32 %v1930, 0.0
        %v1969 = vmax.f32 %v1931, 0.0
        %v1970 = vmax.f32 %v1932, 0.0
        %v1971 = vmax.f32 %v1933, 0.0
        %v1972 = vmax.f32 %v1934, 0.0
        %v1973 = vmax.f32 %v1935, 0.0
        %v1974 = vmax.f32 %v1936, 0.0
        %v1975 = vmax.f32 %v1937, 0.0
        %v1976 = vmax.f32 %v1938, 0.0
        %v1977 = vmax.f32 %v1939, 0.0
        %v1978 = vmax.f32 %v1940, 0.0
        %v1979 = vmax.f32 %v1941, 0.0
        %v1980 = vmax.f32 %v1942, 0.0
        %v1981 = vmax.f32 %v1943, 0.0
        %v1982 = vmax.f32 %v1944, 0.0
        %v1983 = vmax.f32 %v1945, 0.0
        %v1984 = vmax.f32 %v1946, 0.0
        %v1985 = vmax.f32 %v1947, 0.0
        %v1986 = vmax.f32 %v1948, 0.0
        %v1987 = vmax.f32 %v1949, 0.0
        %v1988 = vmax.f32 %v1950, 0.0
        %v1989 = vmax.f32 %v1951, 0.0
        %v1990 = vmax.f32 %v1952, 0.0
        %v1991 = vmax.f32 %v1953, 0.0
        %v1992 = vmax.f32 %v1954, 0.0
        %v1993 = vmax.f32 %v1955, 0.0
        %v1994 = vmax.f32 %v1956, 0.0
        %v1995 = vmax.f32 %v1957, 0.0
        %v1996 = vmax.f32 %v1958, 0.0
        %v1997 = vmax.f32 %v1959, 0.0
        %v1998 = vmax.f32 %v1960, 0.0
        %v1999 = vmax.f32 %v1961, 0.0
        %v2000 = vmax.f32 %v1962, 0.0
        %v2001 = vmax.f32 %v1963, 0.0
        %v2002 = vsub.f32 %v1320, %v1812
        %v2003 = vsub.f32 %v1322, %v1812
        %v2004 = vsub.f32 %v1324, %v1813
        %v2005 = vsub.f32 %v1326, %v1813
        %v2006 = vsub.f32 %v1330, %v1814
        %v2007 = vsub.f32 %v1332, %v1814
        %v2008 = vsub.f32 %v1334, %v1815
        %v2009 = vsub.f32 %v1336, %v1815
        %v2010 = vsub.f32 %v1340, %v1816
        %v2011 = vsub.f32 %v1342, %v1816
        %v2012 = vsub.f32 %v1344, %v1817
        %v2013 = vsub.f32 %v1346, %v1817
        %v2014 = vsub.f32 %v1350, %v1818
        %v2015 = vsub.f32 %v1352, %v1818
        %v2016 = vsub.f32 %v1354, %v1819
        %v2017 = vsub.f32 %v1356, %v1819
        %v2018 = vsub.f32 %v1360, %v1820
        %v2019 = vsub.f32 %v1362, %v1820
        %v2020 = vsub.f32 %v1364, %v1821
        %v2021 = vsub.f32 %v1366, %v1821
        %v2022 = vsub.f32 %v1370, %v1822
        %v2023 = vsub.f32 %v1372, %v1822
        %v2024 = vsub.f32 %v1374, %v1823
        %v2025 = vsub.f32 %v1376, %v1823
        %v2026 = vsub.f32 %v1380, %v1824
        %v2027 = vsub.f32 %v1382, %v1824
        %v2028 = vsub.f32 %v1384, %v1825
        %v2029 = vsub.f32 %v1386, %v1825
        %v2030 = vsub.f32 %v1390, %v1826
        %v2031 = vsub.f32 %v1392, %v1826
        %v2032 = vsub.f32 %v1394, %v1827
        %v2033 = vsub.f32 %v1396, %v1827
        %v2034 = vsub.f32 %v1400, %v1828
        %v2035 = vsub.f32 %v1402, %v1828
        %v2036 = vsub.f32 %v1404, %v1829
        %v2037 = vsub.f32 %v1406, %v1829
        %v2038 = vsub.f32 %v1410, %v1830
        %v2039 = vsub.f32 %v1412, %v1830
        %v2040 = vsub.f32 %v1414, %v1831
        %v2041 = vsub.f32 %v1416, %v1831
        %v2042 = vsub.f32 %v1420, %v1832
        %v2043 = vsub.f32 %v1422, %v1832
        %v2044 = vsub.f32 %v1424, %v1833
        %v2045 = vsub.f32 %v1426, %v1833
        %v2046 = vsub.f32 %v1430, %v1834
        %v2047 = vsub.f32 %v1432, %v1834
        %v2048 = vsub.f32 %v1434, %v1835
        %v2049 = vsub.f32 %v1436, %v1835
        %v2050 = vsub.f32 %v1440, %v1836
        %v2051 = vsub.f32 %v1442, %v1836
        %v2052 = vsub.f32 %v1444, %v1837
        %v2053 = vsub.f32 %v1446, %v1837
        %v2054 = vsub.f32 %v1450, %v1838
        %v2055 = vsub.f32 %v1452, %v1838
        %v2056 = vsub.f32 %v1454, %v1839
        %v2057 = vsub.f32 %v1456, %v1839
        %v2058 = vsub.f32 %v1460, %v1840
        %v2059 = vsub.f32 %v1462, %v1840
        %v2060 = vsub.f32 %v1464, %v1841
        %v2061 = vsub.f32 %v1466, %v1841
        %v2062 = vsub.f32 %v1470, %v1842
        %v2063 = vsub.f32 %v1472, %v1842
        %v2064 = vsub.f32 %v1474, %v1843
        %v2065 = vsub.f32 %v1476, %v1843
        %v2066 = vsub.f32 %v1480, %v1844
        %v2067 = vsub.f32 %v1482, %v1844
        %v2068 = vsub.f32 %v1484, %v1845
        %v2069 = vsub.f32 %v1486, %v1845
        %v2070 = vsub.f32 %v1490, %v1846
        %v2071 = vsub.f32 %v1492, %v1846
        %v2072 = vsub.f32 %v1494, %v1847
        %v2073 = vsub.f32 %v1496, %v1847
        %v2074 = vsub.f32 %v1500, %v1848
        %v2075 = vsub.f32 %v1502, %v1848
        %v2076 = vsub.f32 %v1504, %v1849
        %v2077 = vsub.f32 %v1506, %v1849
        %v2078 = vadd.f32 %v1964, 1e-05
        %v2079 = vadd.f32 %v1965, 1e-05
        %v2080 = vadd.f32 %v1966, 1e-05
        %v2081 = vadd.f32 %v1967, 1e-05
        %v2082 = vadd.f32 %v1968, 1e-05
        %v2083 = vadd.f32 %v1969, 1e-05
        %v2084 = vadd.f32 %v1970, 1e-05
        %v2085 = vadd.f32 %v1971, 1e-05
        %v2086 = vadd.f32 %v1972, 1e-05
        %v2087 = vadd.f32 %v1973, 1e-05
        %v2088 = vadd.f32 %v1974, 1e-05
        %v2089 = vadd.f32 %v1975, 1e-05
        %v2090 = vadd.f32 %v1976, 1e-05
        %v2091 = vadd.f32 %v1977, 1e-05
        %v2092 = vadd.f32 %v1978, 1e-05
        %v2093 = vadd.f32 %v1979, 1e-05
        %v2094 = vadd.f32 %v1980, 1e-05
        %v2095 = vadd.f32 %v1981, 1e-05
        %v2096 = vadd.f32 %v1982, 1e-05
        %v2097 = vadd.f32 %v1983, 1e-05
        %v2098 = vadd.f32 %v1984, 1e-05
        %v2099 = vadd.f32 %v1985, 1e-05
        %v2100 = vadd.f32 %v1986, 1e-05
        %v2101 = vadd.f32 %v1987, 1e-05
        %v2102 = vadd.f32 %v1988, 1e-05
        %v2103 = vadd.f32 %v1989, 1e-05
        %v2104 = vadd.f32 %v1990, 1e-05
        %v2105 = vadd.f32 %v1991, 1e-05
        %v2106 = vadd.f32 %v1992, 1e-05
        %v2107 = vadd.f32 %v1993, 1e-05
        %v2108 = vadd.f32 %v1994, 1e-05
        %v2109 = vadd.f32 %v1995, 1e-05
        %v2110 = vadd.f32 %v1996, 1e-05
        %v2111 = vadd.f32 %v1997, 1e-05
        %v2112 = vadd.f32 %v1998, 1e-05
        %v2113 = vadd.f32 %v1999, 1e-05
        %v2114 = vadd.f32 %v2000, 1e-05
        %v2115 = vadd.f32 %v2001, 1e-05
        %v2116 = vrsqrt.pop %v2078
        %v2117 = vrsqrt.pop %v2079
        %v2118 = vrsqrt.pop %v2080
        %v2119 = vrsqrt.pop %v2081
        %v2120 = vrsqrt.pop %v2082
        %v2121 = vrsqrt.pop %v2083
        %v2122 = vrsqrt.pop %v2084
        %v2123 = vrsqrt.pop %v2085
        %v2124 = vrsqrt.pop %v2086
        %v2125 = vrsqrt.pop %v2087
        %v2126 = vrsqrt.pop %v2088
        %v2127 = vrsqrt.pop %v2089
        %v2128 = vrsqrt.pop %v2090
        %v2129 = vrsqrt.pop %v2091
        %v2130 = vrsqrt.pop %v2092
        %v2131 = vrsqrt.pop %v2093
        %v2132 = vrsqrt.pop %v2094
        %v2133 = vrsqrt.pop %v2095
        %v2134 = vrsqrt.pop %v2096
        %v2135 = vrsqrt.pop %v2097
        %v2136 = vrsqrt.pop %v2098
        %v2137 = vrsqrt.pop %v2099
        %v2138 = vrsqrt.pop %v2100
        %v2139 = vrsqrt.pop %v2101
        %v2140 = vrsqrt.pop %v2102
        %v2141 = vrsqrt.pop %v2103
        %v2142 = vrsqrt.pop %v2104
        %v2143 = vrsqrt.pop %v2105
        %v2144 = vrsqrt.pop %v2106
        %v2145 = vrsqrt.pop %v2107
        %v2146 = vrsqrt.pop %v2108
        %v2147 = vrsqrt.pop %v2109
        %v2148 = vrsqrt.pop %v2110
        %v2149 = vrsqrt.pop %v2111
        %v2150 = vrsqrt.pop %v2112
        %v2151 = vrsqrt.pop %v2113
        %v2152 = vrsqrt.pop %v2114
        %v2153 = vrsqrt.pop %v2115
        %v2154 = vmul.f32 %v2002, %v2116
        %v2155 = vmul.f32 %v2003, %v2116
        %v2156 = vmul.f32 %v2004, %v2117
        %v2157 = vmul.f32 %v2005, %v2117
        %v2158 = vmul.f32 %v2006, %v2118
        %v2159 = vmul.f32 %v2007, %v2118
        %v2160 = vmul.f32 %v2008, %v2119
        %v2161 = vmul.f32 %v2009, %v2119
        %v2162 = vmul.f32 %v2010, %v2120
        %v2163 = vmul.f32 %v2011, %v2120
        %v2164 = vmul.f32 %v2012, %v2121
        %v2165 = vmul.f32 %v2013, %v2121
        %v2166 = vmul.f32 %v2014, %v2122
        %v2167 = vmul.f32 %v2015, %v2122
        %v2168 = vmul.f32 %v2016, %v2123
        %v2169 = vmul.f32 %v2017, %v2123
        %v2170 = vmul.f32 %v2018, %v2124
        %v2171 = vmul.f32 %v2019, %v2124
        %v2172 = vmul.f32 %v2020, %v2125
        %v2173 = vmul.f32 %v2021, %v2125
        %v2174 = vmul.f32 %v2022, %v2126
        %v2175 = vmul.f32 %v2023, %v2126
        %v2176 = vmul.f32 %v2024, %v2127
        %v2177 = vmul.f32 %v2025, %v2127
        %v2178 = vmul.f32 %v2026, %v2128
        %v2179 = vmul.f32 %v2027, %v2128
        %v2180 = vmul.f32 %v2028, %v2129
        %v2181 = vmul.f32 %v2029, %v2129
        %v2182 = vmul.f32 %v2030, %v2130
        %v2183 = vmul.f32 %v2031, %v2130
        %v2184 = vmul.f32 %v2032, %v2131
        %v2185 = vmul.f32 %v2033, %v2131
        %v2186 = vmul.f32 %v2034, %v2132
        %v2187 = vmul.f32 %v2035, %v2132
        %v2188 = vmul.f32 %v2036, %v2133
        %v2189 = vmul.f32 %v2037, %v2133
        %v2190 = vmul.f32 %v2038, %v2134
        %v2191 = vmul.f32 %v2039, %v2134
        %v2192 = vmul.f32 %v2040, %v2135
        %v2193 = vmul.f32 %v2041, %v2135
        %v2194 = vmul.f32 %v2042, %v2136
        %v2195 = vmul.f32 %v2043, %v2136
        %v2196 = vmul.f32 %v2044, %v2137
        %v2197 = vmul.f32 %v2045, %v2137
        %v2198 = vmul.f32 %v2046, %v2138
        %v2199 = vmul.f32 %v2047, %v2138
        %v2200 = vmul.f32 %v2048, %v2139
        %v2201 = vmul.f32 %v2049, %v2139
        %v2202 = vmul.f32 %v2050, %v2140
        %v2203 = vmul.f32 %v2051, %v2140
        %v2204 = vmul.f32 %v2052, %v2141
        %v2205 = vmul.f32 %v2053, %v2141
        %v2206 = vmul.f32 %v2054, %v2142
        %v2207 = vmul.f32 %v2055, %v2142
        %v2208 = vmul.f32 %v2056, %v2143
        %v2209 = vmul.f32 %v2057, %v2143
        %v2210 = vmul.f32 %v2058, %v2144
        %v2211 = vmul.f32 %v2059, %v2144
        %v2212 = vmul.f32 %v2060, %v2145
        %v2213 = vmul.f32 %v2061, %v2145
        %v2214 = vmul.f32 %v2062, %v2146
        %v2215 = vmul.f32 %v2063, %v2146
        %v2216 = vmul.f32 %v2064, %v2147
        %v2217 = vmul.f32 %v2065, %v2147
        %v2218 = vmul.f32 %v2066, %v2148
        %v2219 = vmul.f32 %v2067, %v2148
        %v2220 = vmul.f32 %v2068, %v2149
        %v2221 = vmul.f32 %v2069, %v2149
        %v2222 = vmul.f32 %v2070, %v2150
        %v2223 = vmul.f32 %v2071, %v2150
        %v2224 = vmul.f32 %v2072, %v2151
        %v2225 = vmul.f32 %v2073, %v2151
        %v2226 = vmul.f32 %v2074, %v2152
        %v2227 = vmul.f32 %v2075, %v2152
        %v2228 = vmul.f32 %v2076, %v2153
        %v2229 = vmul.f32 %v2077, %v2153
        %v2230 = vlaneseq
        %v2231 = vshrl.u32 %v2230, 7
        %v2232 = vsub.s32 2, %v2231
        %v2233 = vrot.slane %v318, %v2232
        %v2234 = vlaneseq
        %v2235 = vshrl.u32 %v2234, 7
        %v2236 = vsub.s32 6, %v2235
        %v2237 = vrot.slane %v318, %v2236
        %v2240 = vlaneseq
        %v2241 = vshrl.u32 %v2240, 7
        %v2242 = vsub.s32 2, %v2241
        %v2243 = vrot.slane %v2233, %v2242
        %v2244 = vlaneseq
        %v2245 = vshrl.u32 %v2244, 7
        %v2246 = vsub.s32 2, %v2245
        %v2247 = vrot.slane %v2237, %v2246
        %v2248 = vmul.f32 %v2154, %v2243
        %v2249 = vmul.f32 %v2155, %v2247
        %v2250 = vmul.f32 %v2156, %v2243
        %v2251 = vmul.f32 %v2157, %v2247
        %v2252 = vmul.f32 %v2158, %v2243
        %v2253 = vmul.f32 %v2159, %v2247
        %v2254 = vmul.f32 %v2160, %v2243
        %v2255 = vmul.f32 %v2161, %v2247
        %v2256 = vmul.f32 %v2162, %v2243
        %v2257 = vmul.f32 %v2163, %v2247
        %v2258 = vmul.f32 %v2164, %v2243
        %v2259 = vmul.f32 %v2165, %v2247
        %v2260 = vmul.f32 %v2166, %v2243
        %v2261 = vmul.f32 %v2167, %v2247
        %v2262 = vmul.f32 %v2168, %v2243
        %v2263 = vmul.f32 %v2169, %v2247
        %v2264 = vmul.f32 %v2170, %v2243
        %v2265 = vmul.f32 %v2171, %v2247
        %v2266 = vmul.f32 %v2172, %v2243
        %v2267 = vmul.f32 %v2173, %v2247
        %v2268 = vmul.f32 %v2174, %v2243
        %v2269 = vmul.f32 %v2175, %v2247
        %v2270 = vmul.f32 %v2176, %v2243
        %v2271 = vmul.f32 %v2177, %v2247
        %v2272 = vmul.f32 %v2178, %v2243
        %v2273 = vmul.f32 %v2179, %v2247
        %v2274 = vmul.f32 %v2180, %v2243
        %v2275 = vmul.f32 %v2181, %v2247
        %v2276 = vmul.f32 %v2182, %v2243
        %v2277 = vmul.f32 %v2183, %v2247
        %v2278 = vmul.f32 %v2184, %v2243
        %v2279 = vmul.f32 %v2185, %v2247
        %v2280 = vmul.f32 %v2186, %v2243
        %v2281 = vmul.f32 %v2187, %v2247
        %v2282 = vmul.f32 %v2188, %v2243
        %v2283 = vmul.f32 %v2189, %v2247
        %v2284 = vmul.f32 %v2190, %v2243
        %v2285 = vmul.f32 %v2191, %v2247
        %v2286 = vmul.f32 %v2192, %v2243
        %v2287 = vmul.f32 %v2193, %v2247
        %v2288 = vmul.f32 %v2194, %v2243
        %v2289 = vmul.f32 %v2195, %v2247
        %v2290 = vmul.f32 %v2196, %v2243
        %v2291 = vmul.f32 %v2197, %v2247
        %v2292 = vmul.f32 %v2198, %v2243
        %v2293 = vmul.f32 %v2199, %v2247
        %v2294 = vmul.f32 %v2200, %v2243
        %v2295 = vmul.f32 %v2201, %v2247
        %v2296 = vmul.f32 %v2202, %v2243
        %v2297 = vmul.f32 %v2203, %v2247
        %v2298 = vmul.f32 %v2204, %v2243
        %v2299 = vmul.f32 %v2205, %v2247
        %v2300 = vmul.f32 %v2206, %v2243
        %v2301 = vmul.f32 %v2207, %v2247
        %v2302 = vmul.f32 %v2208, %v2243
        %v2303 = vmul.f32 %v2209, %v2247
        %v2304 = vmul.f32 %v2210, %v2243
        %v2305 = vmul.f32 %v2211, %v2247
        %v2306 = vmul.f32 %v2212, %v2243
        %v2307 = vmul.f32 %v2213, %v2247
        %v2308 = vmul.f32 %v2214, %v2243
        %v2309 = vmul.f32 %v2215, %v2247
        %v2310 = vmul.f32 %v2216, %v2243
        %v2311 = vmul.f32 %v2217, %v2247
        %v2312 = vmul.f32 %v2218, %v2243
        %v2313 = vmul.f32 %v2219, %v2247
        %v2314 = vmul.f32 %v2220, %v2243
        %v2315 = vmul.f32 %v2221, %v2247
        %v2316 = vmul.f32 %v2222, %v2243
        %v2317 = vmul.f32 %v2223, %v2247
        %v2318 = vmul.f32 %v2224, %v2243
        %v2319 = vmul.f32 %v2225, %v2247
        %v2320 = vmul.f32 %v2226, %v2243
        %v2321 = vmul.f32 %v2227, %v2247
        %v2322 = vmul.f32 %v2228, %v2243
        %v2323 = vmul.f32 %v2229, %v2247
        %v2324 = vlaneseq
        %v2325 = vshrl.u32 %v2324, 7
        %v2326 = vsub.s32 3, %v2325
        %v2327 = vrot.slane %v318, %v2326
        %v2328 = vlaneseq
        %v2329 = vshrl.u32 %v2328, 7
        %v2330 = vsub.s32 7, %v2329
        %v2331 = vrot.slane %v318, %v2330
        %v2334 = vlaneseq
        %v2335 = vshrl.u32 %v2334, 7
        %v2336 = vsub.s32 3, %v2335
        %v2337 = vrot.slane %v2327, %v2336
        %v2338 = vlaneseq
        %v2339 = vshrl.u32 %v2338, 7
        %v2340 = vsub.s32 3, %v2339
        %v2341 = vrot.slane %v2331, %v2340
        %v2342 = vadd.f32 %v2248, %v2337
        %v2343 = vadd.f32 %v2249, %v2341
        %v2344 = vadd.f32 %v2250, %v2337
        %v2345 = vadd.f32 %v2251, %v2341
        %v2346 = vadd.f32 %v2252, %v2337
        %v2347 = vadd.f32 %v2253, %v2341
        %v2348 = vadd.f32 %v2254, %v2337
        %v2349 = vadd.f32 %v2255, %v2341
        %v2350 = vadd.f32 %v2256, %v2337
        %v2351 = vadd.f32 %v2257, %v2341
        %v2352 = vadd.f32 %v2258, %v2337
        %v2353 = vadd.f32 %v2259, %v2341
        %v2354 = vadd.f32 %v2260, %v2337
        %v2355 = vadd.f32 %v2261, %v2341
        %v2356 = vadd.f32 %v2262, %v2337
        %v2357 = vadd.f32 %v2263, %v2341
        %v2358 = vadd.f32 %v2264, %v2337
        %v2359 = vadd.f32 %v2265, %v2341
        %v2360 = vadd.f32 %v2266, %v2337
        %v2361 = vadd.f32 %v2267, %v2341
        %v2362 = vadd.f32 %v2268, %v2337
        %v2363 = vadd.f32 %v2269, %v2341
        %v2364 = vadd.f32 %v2270, %v2337
        %v2365 = vadd.f32 %v2271, %v2341
        %v2366 = vadd.f32 %v2272, %v2337
        %v2367 = vadd.f32 %v2273, %v2341
        %v2368 = vadd.f32 %v2274, %v2337
        %v2369 = vadd.f32 %v2275, %v2341
        %v2370 = vadd.f32 %v2276, %v2337
        %v2371 = vadd.f32 %v2277, %v2341
        %v2372 = vadd.f32 %v2278, %v2337
        %v2373 = vadd.f32 %v2279, %v2341
        %v2374 = vadd.f32 %v2280, %v2337
        %v2375 = vadd.f32 %v2281, %v2341
        %v2376 = vadd.f32 %v2282, %v2337
        %v2377 = vadd.f32 %v2283, %v2341
        %v2378 = vadd.f32 %v2284, %v2337
        %v2379 = vadd.f32 %v2285, %v2341
        %v2380 = vadd.f32 %v2286, %v2337
        %v2381 = vadd.f32 %v2287, %v2341
        %v2382 = vadd.f32 %v2288, %v2337
        %v2383 = vadd.f32 %v2289, %v2341
        %v2384 = vadd.f32 %v2290, %v2337
        %v2385 = vadd.f32 %v2291, %v2341
        %v2386 = vadd.f32 %v2292, %v2337
        %v2387 = vadd.f32 %v2293, %v2341
        %v2388 = vadd.f32 %v2294, %v2337
        %v2389 = vadd.f32 %v2295, %v2341
        %v2390 = vadd.f32 %v2296, %v2337
        %v2391 = vadd.f32 %v2297, %v2341
        %v2392 = vadd.f32 %v2298, %v2337
        %v2393 = vadd.f32 %v2299, %v2341
        %v2394 = vadd.f32 %v2300, %v2337
        %v2395 = vadd.f32 %v2301, %v2341
        %v2396 = vadd.f32 %v2302, %v2337
        %v2397 = vadd.f32 %v2303, %v2341
        %v2398 = vadd.f32 %v2304, %v2337
        %v2399 = vadd.f32 %v2305, %v2341
        %v2400 = vadd.f32 %v2306, %v2337
        %v2401 = vadd.f32 %v2307, %v2341
        %v2402 = vadd.f32 %v2308, %v2337
        %v2403 = vadd.f32 %v2309, %v2341
        %v2404 = vadd.f32 %v2310, %v2337
        %v2405 = vadd.f32 %v2311, %v2341
        %v2406 = vadd.f32 %v2312, %v2337
        %v2407 = vadd.f32 %v2313, %v2341
        %v2408 = vadd.f32 %v2314, %v2337
        %v2409 = vadd.f32 %v2315, %v2341
        %v2410 = vadd.f32 %v2316, %v2337
        %v2411 = vadd.f32 %v2317, %v2341
        %v2412 = vadd.f32 %v2318, %v2337
        %v2413 = vadd.f32 %v2319, %v2341
        %v2414 = vadd.f32 %v2320, %v2337
        %v2415 = vadd.f32 %v2321, %v2341
        %v2416 = vadd.f32 %v2322, %v2337
        %v2417 = vadd.f32 %v2323, %v2341
        %2418 = vst [vmem:[%s257] sm:$0xff] %v2342
        %2419 = vst [vmem:[%s257 + $0x8] sm:$0xff] %v2343
        %2420 = vst [vmem:[%s257 + $0x10] sm:$0xff] %v2344
        %2421 = vst [vmem:[%s257 + $0x18] sm:$0xff] %v2345
        %2422 = vst [vmem:[%s257 + $0x20] sm:$0xff] %v2346
        %2423 = vst [vmem:[%s257 + $0x28] sm:$0xff] %v2347
        %2424 = vst [vmem:[%s257 + $0x30] sm:$0xff] %v2348
        %2425 = vst [vmem:[%s257 + $0x38] sm:$0xff] %v2349
        %2426 = vst [vmem:[%s257 + $0x40] sm:$0xff] %v2350
        %2427 = vst [vmem:[%s257 + $0x48] sm:$0xff] %v2351
        %2428 = vst [vmem:[%s257 + $0x50] sm:$0xff] %v2352
        %2429 = vst [vmem:[%s257 + $0x58] sm:$0xff] %v2353
        %2430 = vst [vmem:[%s257 + $0x60] sm:$0xff] %v2354
        %2431 = vst [vmem:[%s257 + $0x68] sm:$0xff] %v2355
        %2432 = vst [vmem:[%s257 + $0x70] sm:$0xff] %v2356
        %2433 = vst [vmem:[%s257 + $0x78] sm:$0xff] %v2357
        %2434 = vst [vmem:[%s257 + $0x80] sm:$0xff] %v2358
        %2435 = vst [vmem:[%s257 + $0x88] sm:$0xff] %v2359
        %2436 = vst [vmem:[%s257 + $0x90] sm:$0xff] %v2360
        %2437 = vst [vmem:[%s257 + $0x98] sm:$0xff] %v2361
        %2438 = vst [vmem:[%s257 + $0xa0] sm:$0xff] %v2362
        %2439 = vst [vmem:[%s257 + $0xa8] sm:$0xff] %v2363
        %2440 = vst [vmem:[%s257 + $0xb0] sm:$0xff] %v2364
        %2441 = vst [vmem:[%s257 + $0xb8] sm:$0xff] %v2365
        %2442 = vst [vmem:[%s257 + $0xc0] sm:$0xff] %v2366
        %2443 = vst [vmem:[%s257 + $0xc8] sm:$0xff] %v2367
        %2444 = vst [vmem:[%s257 + $0xd0] sm:$0xff] %v2368
        %2445 = vst [vmem:[%s257 + $0xd8] sm:$0xff] %v2369
        %2446 = vst [vmem:[%s257 + $0xe0] sm:$0xff] %v2370
        %2447 = vst [vmem:[%s257 + $0xe8] sm:$0xff] %v2371
        %2448 = vst [vmem:[%s257 + $0xf0] sm:$0xff] %v2372
        %2449 = vst [vmem:[%s257 + $0xf8] sm:$0xff] %v2373
        %2450 = vst [vmem:[%s257 + $0x100] sm:$0xff] %v2374
        %2451 = vst [vmem:[%s257 + $0x108] sm:$0xff] %v2375
        %2452 = vst [vmem:[%s257 + $0x110] sm:$0xff] %v2376
        %2453 = vst [vmem:[%s257 + $0x118] sm:$0xff] %v2377
        %2454 = vst [vmem:[%s257 + $0x120] sm:$0xff] %v2378
        %2455 = vst [vmem:[%s257 + $0x128] sm:$0xff] %v2379
        %2456 = vst [vmem:[%s257 + $0x130] sm:$0xff] %v2380
        %2457 = vst [vmem:[%s257 + $0x138] sm:$0xff] %v2381
        %2458 = vst [vmem:[%s257 + $0x140] sm:$0xff] %v2382
        %2459 = vst [vmem:[%s257 + $0x148] sm:$0xff] %v2383
        %2460 = vst [vmem:[%s257 + $0x150] sm:$0xff] %v2384
        %2461 = vst [vmem:[%s257 + $0x158] sm:$0xff] %v2385
        %2462 = vst [vmem:[%s257 + $0x160] sm:$0xff] %v2386
        %2463 = vst [vmem:[%s257 + $0x168] sm:$0xff] %v2387
        %2464 = vst [vmem:[%s257 + $0x170] sm:$0xff] %v2388
        %2465 = vst [vmem:[%s257 + $0x178] sm:$0xff] %v2389
        %2466 = vst [vmem:[%s257 + $0x180] sm:$0xff] %v2390
        %2467 = vst [vmem:[%s257 + $0x188] sm:$0xff] %v2391
        %2468 = vst [vmem:[%s257 + $0x190] sm:$0xff] %v2392
        %2469 = vst [vmem:[%s257 + $0x198] sm:$0xff] %v2393
        %2470 = vst [vmem:[%s257 + $0x1a0] sm:$0xff] %v2394
        %2471 = vst [vmem:[%s257 + $0x1a8] sm:$0xff] %v2395
        %2472 = vst [vmem:[%s257 + $0x1b0] sm:$0xff] %v2396
        %2473 = vst [vmem:[%s257 + $0x1b8] sm:$0xff] %v2397
        %2474 = vst [vmem:[%s257 + $0x1c0] sm:$0xff] %v2398
        %2475 = vst [vmem:[%s257 + $0x1c8] sm:$0xff] %v2399
        %2476 = vst [vmem:[%s257 + $0x1d0] sm:$0xff] %v2400
        %2477 = vst [vmem:[%s257 + $0x1d8] sm:$0xff] %v2401
        %2478 = vst [vmem:[%s257 + $0x1e0] sm:$0xff] %v2402
        %2479 = vst [vmem:[%s257 + $0x1e8] sm:$0xff] %v2403
        %2480 = vst [vmem:[%s257 + $0x1f0] sm:$0xff] %v2404
        %2481 = vst [vmem:[%s257 + $0x1f8] sm:$0xff] %v2405
        %2482 = vst [vmem:[%s257 + $0x200] sm:$0xff] %v2406
        %2483 = vst [vmem:[%s257 + $0x208] sm:$0xff] %v2407
        %2484 = vst [vmem:[%s257 + $0x210] sm:$0xff] %v2408
        %2485 = vst [vmem:[%s257 + $0x218] sm:$0xff] %v2409
        %2486 = vst [vmem:[%s257 + $0x220] sm:$0xff] %v2410
        %2487 = vst [vmem:[%s257 + $0x228] sm:$0xff] %v2411
        %2488 = vst [vmem:[%s257 + $0x230] sm:$0xff] %v2412
        %2489 = vst [vmem:[%s257 + $0x238] sm:$0xff] %v2413
        %2490 = vst [vmem:[%s257 + $0x240] sm:$0xff] %v2414
        %2491 = vst [vmem:[%s257 + $0x248] sm:$0xff] %v2415
        %2492 = vst [vmem:[%s257 + $0x250] sm:$0xff] %v2416
        %2493 = vst [vmem:[%s257 + $0x258] sm:$0xff] %v2417
        %s2494 = sand.u32 %s120, 1
        %s2495 = scalar_lea.sflag [#allocation4], %s2494
        %s2496 = sand.u32 %s120, 1
        %s2497 = smul.addr %s2496, 608
        %s2498 = scalar_lea.vmem [#allocation10], %s2497
        // Predicated region
        $region53: #{tpu_custom_call.1} parent=35 // pred_check
          %p2499 = pneg %p130
        $region54: #{tpu_custom_call.1} parent=35 // pred_check_branch
          %2501 = sbr.rel (%p2499) target = $region56
        $region55: #{tpu_custom_call.1} parent=35 // pred_region
          %s2502 = smul.u32 38, %s23
          %s2504 = ssub.s32 9728, 9728
          %2505 = vsyncadd %s2495, %s2504
          %s2506 = smul.addr %s2502, 2
          %s2507 = smul.addr %s2506, 128
          %s2508 = scalar_lea.hbm %s4, %s2507
          %s2509 = sshll.u32 %s2498, 4
          %s2510 = int_to_ptr.vmem [resolvable:$true] %s2509
          %2515 = dma.vmem_to_hbm [thread:$0]  %s2510, 9728, %s2508, %s2495, 256, 256, 16
        $region56: #{tpu_custom_call.1} parent=35 // pred_fallthru
          _
      $region36: #{tpu_custom_call.1} parent=5 // pred_fallthru
        _
      %p2516 = scmp.le.s32.totalorder 2, %s18
      // Predicated region
      $region57: #{tpu_custom_call.1} parent=5 // pred_check
        %p2517 = pneg %p2516
      $region58: #{tpu_custom_call.1} parent=5 // pred_check_branch
        %2519 = sbr.rel (%p2517) target = $region60
      $region59: #{tpu_custom_call.1} parent=5 // pred_region
        %s2520 = ssub.s32 %s18, 2
        // Predicated region
        $region61: #{tpu_custom_call.1} parent=59 // pred_check
          %p2521 = pneg %p136
        $region62: #{tpu_custom_call.1} parent=59 // pred_check_branch
          %2523 = sbr.rel (%p2521) target = $region64
        $region63: #{tpu_custom_call.1} parent=59 // pred_region
          %s2524 = sand.u32 %s121, 1
          %s2525 = scalar_lea.sflag [#allocation4], %s2524
          %s2526 = sand.u32 %s121, 1
          %s2527 = smul.addr %s2526, 608
          %s2528 = scalar_lea.vmem [#allocation10], %s2527
          %2529 = dma.done %s2525, 9728
        $region64: #{tpu_custom_call.1} parent=59 // pred_fallthru
          _
      $region60: #{tpu_custom_call.1} parent=5 // pred_fallthru
        _
    $region6: #{tpu_custom_call.1} parent=1 // loop_footer
      %s22 = sadd.s32 1, %s18
    $region7: #{tpu_custom_call.1} parent=1 // loop_footer_branch
      %17 = sbr.rel target = $region3
    $region8: #{tpu_custom_call.1} parent=1 // loop_exit
      _
    %2530 = vsyncpa [#allocation3], 1
    %s2531 = scalar_lea.sflag [#allocation3], 1
    %2532 = vsyncpa %s2531, 1
    %2533 = vsyncpa [#allocation6], 1
    %2534 = vsyncpa [#allocation9], 1
    %2535 = vsyncpa [#allocation4], 1
    %s2536 = scalar_lea.sflag [#allocation4], 1
    %2537 = vsyncpa %s2536, 1

</llo_original>
